<compile_context>
chip_gen: v7x
topology: tpu7x:2x2x1
jax: 0.10.0
libtpu: 0.0.40
codegen_flags: <defaults>
</compile_context>

<pallas_src>
import jax
import jax.numpy as jnp
from jax import lax
from jax.experimental import pallas as pl
from jax.experimental.pallas import tpu as pltpu

# ---- module / opt hyper-parameters (deterministic, in-script) ----
KNN = 8
FEAT_DIM = 32        # opt.feat_dim
OT_GAMMA = 1.0       # opt.ot_gamma
OT_EPS = 1e-06       # opt.ot_eps
OT_ITER = 20         # opt.ot_iter
OT_POWER = 2         # opt.ot_power (== 2 -> implemented as M * M)
# opt.ot_method == 'cos'

# Set to jnp.bfloat16 on v5e to use the bf16-native MXU path for the fused
# embed matmul (f32 accumulation kept via preferred_element_type).  Default
# f32 matches PyTorch numerics on all generations.
MATMUL_INPUT_DTYPE = jnp.float32


def _embed_ot(x, w, b):
    """Shared fused math: Embed_s+Embed_t -> cosine -> minmax_pow -> sinkhorn.

    x: (B, s_dim + t_dim)  = [flatten(f_s) | flatten(f_t)]
    w: (s_dim + t_dim, 2*feat_dim) block-diagonal pre-transposed Linear weights
    b: (1, 2*feat_dim)             = [b_s | b_t]
    Returns (P, M), both (B, B) float32.
    """
    # One MXU push/drain for both Linears (f32 accumulation).
    emb = jnp.dot(x, w, preferred_element_type=jnp.float32) + b      # (B, 2F)
    fdim = emb.shape[1] // 2
    f_es = emb[:, :fdim]
    f_et = emb[:, fdim:]
    # Normalize(power=2): x * rsqrt(sum(x^2)) on the EUP slot (reference has no eps).
    f_es = f_es * lax.rsqrt(jnp.sum(f_es * f_es, axis=1, keepdims=True))
    f_et = f_et * lax.rsqrt(jnp.sum(f_et * f_et, axis=1, keepdims=True))

    # cosine_similarity(cat([f_et, f_es], 0))[0:n, n:] == f_et @ f_es^T since
    # rows are already unit norm; contract last dims (no transpose relayout).
    M = lax.dot_general(f_et, f_es,
                        dimension_numbers=(((1,), (1,)), ((), ())),
                        preferred_element_type=jnp.float32)          # (B, B)

    # ---- minmax_pow (ot_power == 2) ----
    # The rowmax divide is kept as an exact divide (one-off op) so that
    # rowmax(M) == 1 exactly, which makes the elided amin reduce below exact.
    # Like the reference, the divide is unguarded against a constant row.
    M = M * M
    M = M - jnp.min(M, axis=-1, keepdims=True)
    M = M / jnp.max(M, axis=-1, keepdims=True)

    # ---- sinkhorn(1 - M, gamma, eps, maxiters), r = c = 1/n ----
    # rowmin(1 - M) == 1 - rowmax(M) == 0 exactly, so the reference's
    # `Min - amin(Min, -1, keepdim)` shift is an exact no-op and is elided.
    n = M.shape[0]
    r = 1.0 / n
    c = 1.0 / n
    P0 = jnp.exp(-OT_GAMMA * (1.0 - M))

    # Fixed-trip, fully unrolled loop with a latched `run` gate (1.0 while
    # iterating, 0.0 after the break fired).  Reproduces the torch break
    # exactly: when max|beta - c| <= eps (note `<=`, as in the reference) the
    # row-normalized P is kept (no column step) and P is frozen thereafter.
    # All selects are arithmetic blends (pure VPU); divides are EUP reciprocals.
    def body(_, state):
        P, run = state
        alpha = jnp.sum(P, axis=-1, keepdims=True)                 # (n, 1)
        P_row = P * (pl.reciprocal(alpha, approx=True) * r)        # row normalize
        beta = jnp.sum(P_row, axis=0, keepdims=True)               # (1, n)
        hit = (jnp.max(jnp.abs(beta - c)) <= OT_EPS).astype(jnp.float32)
        P_col = P_row * (pl.reciprocal(beta, approx=True) * c)     # column normalize
        P_step = hit * P_row + (1.0 - hit) * P_col                 # break keeps row step
        P_new = run * P_step + (1.0 - run) * P                     # freeze after break
        return P_new, run * (1.0 - hit)

    P, _ = lax.fori_loop(0, OT_ITER, body, (P0, jnp.float32(1.0)), unroll=True)
    return P, M


def mixgnn_kernel(x_ref, w_ref, b_ref, loss_ref, p_ref, m_ref):
    """Single-instance kernel: whole-array VMEM blocks, scalar loss via SMEM."""
    P, M = _embed_ot(x_ref[...], w_ref[...], b_ref[...])
    loss_ref[0, 0] = jnp.sum(P * M)            # scalar -> SMEM
    p_ref[...] = P
    m_ref[...] = M


def mixgnn_kernel_batched(x_ref, w_ref, b_ref, p_ref, m_ref):
    """Per-grid-step kernel for the batched (launch-amortized) path.

    The per-instance scalar loss (a 32-element reduce) is computed in the
    wrapper from P and M to keep the blocked outputs layout-trivial.
    """
    P, M = _embed_ot(x_ref[...], w_ref[...], b_ref[...])
    p_ref[...] = P
    m_ref[...] = M


def prepare_params(W_s, b_s, W_t, b_t):
    """One-time parameter prep (hoisted out of the per-call path):

    Packs both nn.Linear weights into a single block-diagonal, pre-transposed
    matrix so the kernel runs one fused MXU dot:
        [fs | ft] @ [[W_s^T, 0], [0, W_t^T]] + [b_s | b_t]
    """
    W_s = jnp.asarray(W_s, jnp.float32)        # (feat_dim, s_dim)
    W_t = jnp.asarray(W_t, jnp.float32)        # (feat_dim, t_dim)
    fdim, s_dim = W_s.shape
    _, t_dim = W_t.shape
    W_bd = jnp.zeros((s_dim + t_dim, 2 * fdim), jnp.float32)
    W_bd = W_bd.at[:s_dim, :fdim].set(W_s.T)
    W_bd = W_bd.at[s_dim:, fdim:].set(W_t.T)
    b_cat = jnp.concatenate([jnp.asarray(b_s, jnp.float32).reshape(-1),
                             jnp.asarray(b_t, jnp.float32).reshape(-1)]).reshape(1, -1)
    return {"W": W_bd.astype(MATMUL_INPUT_DTYPE), "b": b_cat}


@jax.jit
def mixgnn_loss_forward(f_s, f_t, params):
    """One (f_s, f_t) pair: single pallas_call, no grid, whole-array blocks."""
    B = f_s.shape[0]
    x = jnp.concatenate([f_s.reshape(B, -1), f_t.reshape(B, -1)],
                        axis=1).astype(MATMUL_INPUT_DTYPE)
    vmem = pl.BlockSpec(memory_space=pltpu.MemorySpace.VMEM)
    smem = pl.BlockSpec(memory_space=pltpu.MemorySpace.SMEM)
    loss, P, M = pl.pallas_call(
        mixgnn_kernel,
        out_shape=(
            jax.ShapeDtypeStruct((1, 1), jnp.float32),   # loss_e (SMEM scalar)
            jax.ShapeDtypeStruct((B, B), jnp.float32),   # P
            jax.ShapeDtypeStruct((B, B), jnp.float32),   # M
        ),
        in_specs=[vmem, vmem, vmem],
        out_specs=(smem, vmem, vmem),
    )(x, params["W"], params["b"])
    return loss[0, 0], P, M


@jax.jit
def mixgnn_loss_forward_batched(f_s, f_t, params):
    """N stacked (f_s, f_t) pairs in ONE pallas_call.

    Leading grid axis marked "parallel": amortizes the fixed pallas_call /
    DMA-setup overhead (this kernel is launch-latency-bound) and lets the two
    v7x TensorCores each take a slice of the instances.
    f_s: (N, B, C_s, H, W);  f_t: (N, B, C_t, H, W)
    """
    N, B = f_s.shape[0], f_s.shape[1]
    x = jnp.concatenate([f_s.reshape(N, B, -1), f_t.reshape(N, B, -1)],
                        axis=2).astype(MATMUL_INPUT_DTYPE)
    K = x.shape[2]
    F2 = params["W"].shape[1]
    P, M = pl.pallas_call(
        mixgnn_kernel_batched,
        grid=(N,),
        out_shape=(
            jax.ShapeDtypeStruct((N, B, B), jnp.float32),   # P
            jax.ShapeDtypeStruct((N, B, B), jnp.float32),   # M
        ),
        in_specs=[
            pl.BlockSpec((None, B, K), lambda n: (n, 0, 0)),   # per-instance activations
            pl.BlockSpec((K, F2), lambda n: (0, 0)),           # shared weights (resident)
            pl.BlockSpec((1, F2), lambda n: (0, 0)),           # shared bias
        ],
        out_specs=(
            pl.BlockSpec((None, B, B), lambda n: (n, 0, 0)),
            pl.BlockSpec((None, B, B), lambda n: (n, 0, 0)),
        ),
        compiler_params=pltpu.CompilerParams(
            dimension_semantics=("parallel",)),
    )(x, params["W"], params["b"])
    loss = jnp.sum(P * M, axis=(1, 2))
    return loss, P, M


def mixgnn_loss(epoch, f_s, l_s, f_t, l_t, params):
    """Mirrors MIXGNNLoss.forward control flow."""
    batch_size = f_s.shape[0]
    loss_e, P, M = mixgnn_loss_forward(f_s, f_t, params)
    if batch_size < KNN:
        return loss_e, P, M
    # TODO(synk): knn_graph + DGLGraph + TAGConv GNN branch (batchSize >= knn)
    # relies on DGL sparse graph machinery and has no clean Pallas equivalent.
    raise NotImplementedError("GNN branch (batchSize >= knn) not implemented")


if __name__ == "__main__":
    key = jax.random.PRNGKey(0)
    k1, k2, k3, k4, k5, k6, k7, k8 = jax.random.split(key, 8)

    # Small NCHW conv-feature shapes (batch < knn=8 -> OT-only path)
    B, C_s, C_t, H, W = 4, 4, 8, 8, 8
    s_dim = C_s * H * W     # 256
    t_dim = C_t * H * W     # 512
    num_classes = 10

    f_s = jax.random.normal(k1, (B, C_s, H, W), jnp.float32)    # student feature
    f_t = jax.random.normal(k2, (B, C_t, H, W), jnp.float32)    # teacher feature
    l_s = jax.random.normal(k3, (B, num_classes), jnp.float32)  # logits (GNN branch only)
    l_t = jax.random.normal(k4, (B, num_classes), jnp.float32)

    # Deterministic Embed parameters (nn.Linear-style uniform init), packed
    # once into the fused block-diagonal layout via prepare_params.
    lim_s = 1.0 / (s_dim ** 0.5)
    lim_t = 1.0 / (t_dim ** 0.5)
    W_s = jax.random.uniform(k5, (FEAT_DIM, s_dim), jnp.float32, -lim_s, lim_s)
    b_s = jax.random.uniform(k6, (FEAT_DIM,), jnp.float32, -lim_s, lim_s)
    W_t = jax.random.uniform(k7, (FEAT_DIM, t_dim), jnp.float32, -lim_t, lim_t)
    b_t = jax.random.uniform(k8, (FEAT_DIM,), jnp.float32, -lim_t, lim_t)
    params = prepare_params(W_s, b_s, W_t, b_t)

    # Single-instance path (mirrors MIXGNNLoss.forward, batchSize < knn).
    loss_e, P, M = mixgnn_loss(0, f_s, l_s, f_t, l_t, params)
    jax.block_until_ready((loss_e, P, M))
    assert jnp.isfinite(loss_e)
    assert bool(jnp.all(jnp.isfinite(P))) and bool(jnp.all(jnp.isfinite(M)))

    # Launch-amortized path: two (f_s, f_t) pairs in one pallas_call.
    fs_stack = jnp.stack([f_s, f_s * 0.5 + 0.1])
    ft_stack = jnp.stack([f_t, f_t * 0.5 - 0.1])
    loss_b, P_b, M_b = mixgnn_loss_forward_batched(fs_stack, ft_stack, params)
    jax.block_until_ready((loss_b, P_b, M_b))
    assert bool(jnp.all(jnp.isfinite(loss_b)))
    assert bool(jnp.all(jnp.isfinite(P_b))) and bool(jnp.all(jnp.isfinite(M_b)))
    # Instance 0 of the batched call must agree with the single-instance call.
    assert jnp.allclose(M_b[0], M, rtol=1e-5, atol=1e-6)
    assert jnp.allclose(P_b[0], P, rtol=1e-5, atol=1e-6)
    assert jnp.allclose(loss_b[0], loss_e, rtol=1e-5, atol=1e-6)

    print("KERNEL_OK")
</pallas_src>

<mosaic_0001>
module attributes {stable_mosaic.version = 11 : i64} {
  func.func @mixgnn_kernel(%arg0: memref<4x768xf32, #tpu.memory_space<vmem>>, %arg1: memref<768x64xf32, #tpu.memory_space<vmem>>, %arg2: memref<1x64xf32, #tpu.memory_space<vmem>>, %arg3: memref<1x1xf32, #tpu.memory_space<smem>>, %arg4: memref<4x4xf32, #tpu.memory_space<vmem>>, %arg5: memref<4x4xf32, #tpu.memory_space<vmem>>) attributes {dimension_semantics = [], scalar_prefetch = 0 : i64, scratch_operands = 0 : i64, tpu.core_type = #tpu.core_type<tc>} {
    %c0 = arith.constant 0 : index
    %c0_0 = arith.constant 0 : index
    %0 = vector.load %arg0[%c0, %c0_0] : memref<4x768xf32, #tpu.memory_space<vmem>>, vector<4x768xf32>
    %c0_1 = arith.constant 0 : index
    %c0_2 = arith.constant 0 : index
    %1 = vector.load %arg1[%c0_1, %c0_2] : memref<768x64xf32, #tpu.memory_space<vmem>>, vector<768x64xf32>
    %c0_3 = arith.constant 0 : index
    %c0_4 = arith.constant 0 : index
    %2 = vector.load %arg2[%c0_3, %c0_4] : memref<1x64xf32, #tpu.memory_space<vmem>>, vector<1x64xf32>
    %cst = arith.constant dense<0.000000e+00> : vector<4x64xf32>
    %3 = tpu.matmul %0, %1, %cst {dimension_numbers = #tpu.dot_dimension_numbers<[1], [0], [0], [1], [0, 0, 1, 1], [], []>} : vector<4x768xf32>, vector<768x64xf32>, vector<4x64xf32> -> vector<4x64xf32>
    %4 = vector.broadcast %2 : vector<1x64xf32> to vector<4x64xf32>
    %5 = arith.addf %3, %4 : vector<4x64xf32>
    %6 = vector.extract_strided_slice %5 {offsets = [0, 0], sizes = [4, 32], strides = [1, 1]} : vector<4x64xf32> to vector<4x32xf32>
    %7 = vector.extract_strided_slice %5 {offsets = [0, 32], sizes = [4, 32], strides = [1, 1]} : vector<4x64xf32> to vector<4x32xf32>
    %8 = arith.mulf %6, %6 : vector<4x32xf32>
    %cst_5 = arith.constant dense<0.000000e+00> : vector<4xf32>
    %9 = vector.multi_reduction <add>, %8, %cst_5 [1] : vector<4x32xf32> to vector<4xf32>
    %10 = vector.shape_cast %9 : vector<4xf32> to vector<4x1xf32>
    %11 = math.rsqrt %10 : vector<4x1xf32>
    %12 = vector.broadcast %11 : vector<4x1xf32> to vector<4x32xf32>
    %13 = arith.mulf %6, %12 : vector<4x32xf32>
    %14 = arith.mulf %7, %7 : vector<4x32xf32>
    %cst_6 = arith.constant dense<0.000000e+00> : vector<4xf32>
    %15 = vector.multi_reduction <add>, %14, %cst_6 [1] : vector<4x32xf32> to vector<4xf32>
    %16 = vector.shape_cast %15 : vector<4xf32> to vector<4x1xf32>
    %17 = math.rsqrt %16 : vector<4x1xf32>
    %18 = vector.broadcast %17 : vector<4x1xf32> to vector<4x32xf32>
    %19 = arith.mulf %7, %18 : vector<4x32xf32>
    %cst_7 = arith.constant dense<0.000000e+00> : vector<4x4xf32>
    %20 = tpu.matmul %19, %13, %cst_7 {dimension_numbers = #tpu.dot_dimension_numbers<[1], [1], [0], [0], [0, 0, 1, 0], [], []>} : vector<4x32xf32>, vector<4x32xf32>, vector<4x4xf32> -> vector<4x4xf32>
    %21 = arith.mulf %20, %20 : vector<4x4xf32>
    %cst_8 = arith.constant dense<0x7F800000> : vector<4xf32>
    %22 = vector.multi_reduction <minimumf>, %21, %cst_8 [1] : vector<4x4xf32> to vector<4xf32>
    %23 = vector.shape_cast %22 : vector<4xf32> to vector<4x1xf32>
    %24 = vector.broadcast %23 : vector<4x1xf32> to vector<4x4xf32>
    %25 = arith.subf %21, %24 : vector<4x4xf32>
    %cst_9 = arith.constant dense<0xFF800000> : vector<4xf32>
    %26 = vector.multi_reduction <maximumf>, %25, %cst_9 [1] : vector<4x4xf32> to vector<4xf32>
    %27 = vector.shape_cast %26 : vector<4xf32> to vector<4x1xf32>
    %28 = vector.broadcast %27 : vector<4x1xf32> to vector<4x4xf32>
    %29 = arith.divf %25, %28 : vector<4x4xf32>
    %cst_10 = arith.constant 1.000000e+00 : f32
    %30 = vector.broadcast %cst_10 : f32 to vector<4x4xf32>
    %31 = arith.subf %30, %29 : vector<4x4xf32>
    %cst_11 = arith.constant -1.000000e+00 : f32
    %32 = vector.broadcast %cst_11 : f32 to vector<4x4xf32>
    %33 = arith.mulf %32, %31 : vector<4x4xf32>
    %34 = math.exp %33 : vector<4x4xf32>
    %cst_12 = arith.constant 1.000000e+00 : f32
    %c0_i32 = arith.constant 0 : i32
    %cst_13 = arith.constant dense<0.000000e+00> : vector<4xf32>
    %35 = vector.multi_reduction <add>, %34, %cst_13 [1] : vector<4x4xf32> to vector<4xf32>
    %36 = vector.shape_cast %35 : vector<4xf32> to vector<4x1xf32>
    %37 = tpu.reciprocal %36 {approx = true} : vector<4x1xf32> -> vector<4x1xf32>
    %cst_14 = arith.constant 2.500000e-01 : f32
    %38 = vector.broadcast %cst_14 : f32 to vector<4x1xf32>
    %39 = arith.mulf %37, %38 : vector<4x1xf32>
    %40 = vector.broadcast %39 : vector<4x1xf32> to vector<4x4xf32>
    %41 = arith.mulf %34, %40 : vector<4x4xf32>
    %cst_15 = arith.constant dense<0.000000e+00> : vector<4xf32>
    %42 = vector.multi_reduction <add>, %41, %cst_15 [0] : vector<4x4xf32> to vector<4xf32>
    %43 = vector.shape_cast %42 : vector<4xf32> to vector<1x4xf32>
    %cst_16 = arith.constant 2.500000e-01 : f32
    %44 = vector.broadcast %cst_16 : f32 to vector<1x4xf32>
    %45 = arith.subf %43, %44 : vector<1x4xf32>
    %46 = math.absf %45 : vector<1x4xf32>
    %47 = vector.shape_cast %46 : vector<1x4xf32> to vector<1x1x4xf32>
    %cst_17 = arith.constant dense<0xFF800000> : vector<1xf32>
    %48 = vector.multi_reduction <maximumf>, %47, %cst_17 [1, 2] : vector<1x1x4xf32> to vector<1xf32>
    %49 = vector.shape_cast %48 : vector<1xf32> to vector<1x1x1xf32>
    %50 = vector.extract %49[0, 0, 0] : f32 from vector<1x1x1xf32>
    %cst_18 = arith.constant 9.99999997E-7 : f32
    %51 = arith.cmpf ole, %50, %cst_18 : f32
    %52 = arith.extui %51 : i1 to i32
    %53 = arith.sitofp %52 : i32 to f32
    %54 = tpu.reciprocal %43 {approx = true} : vector<1x4xf32> -> vector<1x4xf32>
    %cst_19 = arith.constant 2.500000e-01 : f32
    %55 = vector.broadcast %cst_19 : f32 to vector<1x4xf32>
    %56 = arith.mulf %54, %55 : vector<1x4xf32>
    %57 = vector.broadcast %56 : vector<1x4xf32> to vector<4x4xf32>
    %58 = arith.mulf %41, %57 : vector<4x4xf32>
    %59 = vector.broadcast %53 : f32 to vector<4x4xf32>
    %60 = arith.mulf %59, %41 : vector<4x4xf32>
    %cst_20 = arith.constant 1.000000e+00 : f32
    %61 = arith.subf %cst_20, %53 : f32
    %62 = vector.broadcast %61 : f32 to vector<4x4xf32>
    %63 = arith.mulf %62, %58 : vector<4x4xf32>
    %64 = arith.addf %60, %63 : vector<4x4xf32>
    %65 = vector.broadcast %cst_12 : f32 to vector<4x4xf32>
    %66 = arith.mulf %65, %64 : vector<4x4xf32>
    %cst_21 = arith.constant 1.000000e+00 : f32
    %67 = arith.subf %cst_21, %cst_12 : f32
    %68 = vector.broadcast %67 : f32 to vector<4x4xf32>
    %69 = arith.mulf %68, %34 : vector<4x4xf32>
    %70 = arith.addf %66, %69 : vector<4x4xf32>
    %cst_22 = arith.constant 1.000000e+00 : f32
    %71 = arith.subf %cst_22, %53 : f32
    %72 = arith.mulf %cst_12, %71 : f32
    %c1_i32 = arith.constant 1 : i32
    %cst_23 = arith.constant dense<0.000000e+00> : vector<4xf32>
    %73 = vector.multi_reduction <add>, %70, %cst_23 [1] : vector<4x4xf32> to vector<4xf32>
    %74 = vector.shape_cast %73 : vector<4xf32> to vector<4x1xf32>
    %75 = tpu.reciprocal %74 {approx = true} : vector<4x1xf32> -> vector<4x1xf32>
    %cst_24 = arith.constant 2.500000e-01 : f32
    %76 = vector.broadcast %cst_24 : f32 to vector<4x1xf32>
    %77 = arith.mulf %75, %76 : vector<4x1xf32>
    %78 = vector.broadcast %77 : vector<4x1xf32> to vector<4x4xf32>
    %79 = arith.mulf %70, %78 : vector<4x4xf32>
    %cst_25 = arith.constant dense<0.000000e+00> : vector<4xf32>
    %80 = vector.multi_reduction <add>, %79, %cst_25 [0] : vector<4x4xf32> to vector<4xf32>
    %81 = vector.shape_cast %80 : vector<4xf32> to vector<1x4xf32>
    %cst_26 = arith.constant 2.500000e-01 : f32
    %82 = vector.broadcast %cst_26 : f32 to vector<1x4xf32>
    %83 = arith.subf %81, %82 : vector<1x4xf32>
    %84 = math.absf %83 : vector<1x4xf32>
    %85 = vector.shape_cast %84 : vector<1x4xf32> to vector<1x1x4xf32>
    %cst_27 = arith.constant dense<0xFF800000> : vector<1xf32>
    %86 = vector.multi_reduction <maximumf>, %85, %cst_27 [1, 2] : vector<1x1x4xf32> to vector<1xf32>
    %87 = vector.shape_cast %86 : vector<1xf32> to vector<1x1x1xf32>
    %88 = vector.extract %87[0, 0, 0] : f32 from vector<1x1x1xf32>
    %cst_28 = arith.constant 9.99999997E-7 : f32
    %89 = arith.cmpf ole, %88, %cst_28 : f32
    %90 = arith.extui %89 : i1 to i32
    %91 = arith.sitofp %90 : i32 to f32
    %92 = tpu.reciprocal %81 {approx = true} : vector<1x4xf32> -> vector<1x4xf32>
    %cst_29 = arith.constant 2.500000e-01 : f32
    %93 = vector.broadcast %cst_29 : f32 to vector<1x4xf32>
    %94 = arith.mulf %92, %93 : vector<1x4xf32>
    %95 = vector.broadcast %94 : vector<1x4xf32> to vector<4x4xf32>
    %96 = arith.mulf %79, %95 : vector<4x4xf32>
    %97 = vector.broadcast %91 : f32 to vector<4x4xf32>
    %98 = arith.mulf %97, %79 : vector<4x4xf32>
    %cst_30 = arith.constant 1.000000e+00 : f32
    %99 = arith.subf %cst_30, %91 : f32
    %100 = vector.broadcast %99 : f32 to vector<4x4xf32>
    %101 = arith.mulf %100, %96 : vector<4x4xf32>
    %102 = arith.addf %98, %101 : vector<4x4xf32>
    %103 = vector.broadcast %72 : f32 to vector<4x4xf32>
    %104 = arith.mulf %103, %102 : vector<4x4xf32>
    %cst_31 = arith.constant 1.000000e+00 : f32
    %105 = arith.subf %cst_31, %72 : f32
    %106 = vector.broadcast %105 : f32 to vector<4x4xf32>
    %107 = arith.mulf %106, %70 : vector<4x4xf32>
    %108 = arith.addf %104, %107 : vector<4x4xf32>
    %cst_32 = arith.constant 1.000000e+00 : f32
    %109 = arith.subf %cst_32, %91 : f32
    %110 = arith.mulf %72, %109 : f32
    %c2_i32 = arith.constant 2 : i32
    %cst_33 = arith.constant dense<0.000000e+00> : vector<4xf32>
    %111 = vector.multi_reduction <add>, %108, %cst_33 [1] : vector<4x4xf32> to vector<4xf32>
    %112 = vector.shape_cast %111 : vector<4xf32> to vector<4x1xf32>
    %113 = tpu.reciprocal %112 {approx = true} : vector<4x1xf32> -> vector<4x1xf32>
    %cst_34 = arith.constant 2.500000e-01 : f32
    %114 = vector.broadcast %cst_34 : f32 to vector<4x1xf32>
    %115 = arith.mulf %113, %114 : vector<4x1xf32>
    %116 = vector.broadcast %115 : vector<4x1xf32> to vector<4x4xf32>
    %117 = arith.mulf %108, %116 : vector<4x4xf32>
    %cst_35 = arith.constant dense<0.000000e+00> : vector<4xf32>
    %118 = vector.multi_reduction <add>, %117, %cst_35 [0] : vector<4x4xf32> to vector<4xf32>
    %119 = vector.shape_cast %118 : vector<4xf32> to vector<1x4xf32>
    %cst_36 = arith.constant 2.500000e-01 : f32
    %120 = vector.broadcast %cst_36 : f32 to vector<1x4xf32>
    %121 = arith.subf %119, %120 : vector<1x4xf32>
    %122 = math.absf %121 : vector<1x4xf32>
    %123 = vector.shape_cast %122 : vector<1x4xf32> to vector<1x1x4xf32>
    %cst_37 = arith.constant dense<0xFF800000> : vector<1xf32>
    %124 = vector.multi_reduction <maximumf>, %123, %cst_37 [1, 2] : vector<1x1x4xf32> to vector<1xf32>
    %125 = vector.shape_cast %124 : vector<1xf32> to vector<1x1x1xf32>
    %126 = vector.extract %125[0, 0, 0] : f32 from vector<1x1x1xf32>
    %cst_38 = arith.constant 9.99999997E-7 : f32
    %127 = arith.cmpf ole, %126, %cst_38 : f32
    %128 = arith.extui %127 : i1 to i32
    %129 = arith.sitofp %128 : i32 to f32
    %130 = tpu.reciprocal %119 {approx = true} : vector<1x4xf32> -> vector<1x4xf32>
    %cst_39 = arith.constant 2.500000e-01 : f32
    %131 = vector.broadcast %cst_39 : f32 to vector<1x4xf32>
    %132 = arith.mulf %130, %131 : vector<1x4xf32>
    %133 = vector.broadcast %132 : vector<1x4xf32> to vector<4x4xf32>
    %134 = arith.mulf %117, %133 : vector<4x4xf32>
    %135 = vector.broadcast %129 : f32 to vector<4x4xf32>
    %136 = arith.mulf %135, %117 : vector<4x4xf32>
    %cst_40 = arith.constant 1.000000e+00 : f32
    %137 = arith.subf %cst_40, %129 : f32
    %138 = vector.broadcast %137 : f32 to vector<4x4xf32>
    %139 = arith.mulf %138, %134 : vector<4x4xf32>
    %140 = arith.addf %136, %139 : vector<4x4xf32>
    %141 = vector.broadcast %110 : f32 to vector<4x4xf32>
    %142 = arith.mulf %141, %140 : vector<4x4xf32>
    %cst_41 = arith.constant 1.000000e+00 : f32
    %143 = arith.subf %cst_41, %110 : f32
    %144 = vector.broadcast %143 : f32 to vector<4x4xf32>
    %145 = arith.mulf %144, %108 : vector<4x4xf32>
    %146 = arith.addf %142, %145 : vector<4x4xf32>
    %cst_42 = arith.constant 1.000000e+00 : f32
    %147 = arith.subf %cst_42, %129 : f32
    %148 = arith.mulf %110, %147 : f32
    %c3_i32 = arith.constant 3 : i32
    %cst_43 = arith.constant dense<0.000000e+00> : vector<4xf32>
    %149 = vector.multi_reduction <add>, %146, %cst_43 [1] : vector<4x4xf32> to vector<4xf32>
    %150 = vector.shape_cast %149 : vector<4xf32> to vector<4x1xf32>
    %151 = tpu.reciprocal %150 {approx = true} : vector<4x1xf32> -> vector<4x1xf32>
    %cst_44 = arith.constant 2.500000e-01 : f32
    %152 = vector.broadcast %cst_44 : f32 to vector<4x1xf32>
    %153 = arith.mulf %151, %152 : vector<4x1xf32>
    %154 = vector.broadcast %153 : vector<4x1xf32> to vector<4x4xf32>
    %155 = arith.mulf %146, %154 : vector<4x4xf32>
    %cst_45 = arith.constant dense<0.000000e+00> : vector<4xf32>
    %156 = vector.multi_reduction <add>, %155, %cst_45 [0] : vector<4x4xf32> to vector<4xf32>
    %157 = vector.shape_cast %156 : vector<4xf32> to vector<1x4xf32>
    %cst_46 = arith.constant 2.500000e-01 : f32
    %158 = vector.broadcast %cst_46 : f32 to vector<1x4xf32>
    %159 = arith.subf %157, %158 : vector<1x4xf32>
    %160 = math.absf %159 : vector<1x4xf32>
    %161 = vector.shape_cast %160 : vector<1x4xf32> to vector<1x1x4xf32>
    %cst_47 = arith.constant dense<0xFF800000> : vector<1xf32>
    %162 = vector.multi_reduction <maximumf>, %161, %cst_47 [1, 2] : vector<1x1x4xf32> to vector<1xf32>
    %163 = vector.shape_cast %162 : vector<1xf32> to vector<1x1x1xf32>
    %164 = vector.extract %163[0, 0, 0] : f32 from vector<1x1x1xf32>
    %cst_48 = arith.constant 9.99999997E-7 : f32
    %165 = arith.cmpf ole, %164, %cst_48 : f32
    %166 = arith.extui %165 : i1 to i32
    %167 = arith.sitofp %166 : i32 to f32
    %168 = tpu.reciprocal %157 {approx = true} : vector<1x4xf32> -> vector<1x4xf32>
    %cst_49 = arith.constant 2.500000e-01 : f32
    %169 = vector.broadcast %cst_49 : f32 to vector<1x4xf32>
    %170 = arith.mulf %168, %169 : vector<1x4xf32>
    %171 = vector.broadcast %170 : vector<1x4xf32> to vector<4x4xf32>
    %172 = arith.mulf %155, %171 : vector<4x4xf32>
    %173 = vector.broadcast %167 : f32 to vector<4x4xf32>
    %174 = arith.mulf %173, %155 : vector<4x4xf32>
    %cst_50 = arith.constant 1.000000e+00 : f32
    %175 = arith.subf %cst_50, %167 : f32
    %176 = vector.broadcast %175 : f32 to vector<4x4xf32>
    %177 = arith.mulf %176, %172 : vector<4x4xf32>
    %178 = arith.addf %174, %177 : vector<4x4xf32>
    %179 = vector.broadcast %148 : f32 to vector<4x4xf32>
    %180 = arith.mulf %179, %178 : vector<4x4xf32>
    %cst_51 = arith.constant 1.000000e+00 : f32
    %181 = arith.subf %cst_51, %148 : f32
    %182 = vector.broadcast %181 : f32 to vector<4x4xf32>
    %183 = arith.mulf %182, %146 : vector<4x4xf32>
    %184 = arith.addf %180, %183 : vector<4x4xf32>
    %cst_52 = arith.constant 1.000000e+00 : f32
    %185 = arith.subf %cst_52, %167 : f32
    %186 = arith.mulf %148, %185 : f32
    %c4_i32 = arith.constant 4 : i32
    %cst_53 = arith.constant dense<0.000000e+00> : vector<4xf32>
    %187 = vector.multi_reduction <add>, %184, %cst_53 [1] : vector<4x4xf32> to vector<4xf32>
    %188 = vector.shape_cast %187 : vector<4xf32> to vector<4x1xf32>
    %189 = tpu.reciprocal %188 {approx = true} : vector<4x1xf32> -> vector<4x1xf32>
    %cst_54 = arith.constant 2.500000e-01 : f32
    %190 = vector.broadcast %cst_54 : f32 to vector<4x1xf32>
    %191 = arith.mulf %189, %190 : vector<4x1xf32>
    %192 = vector.broadcast %191 : vector<4x1xf32> to vector<4x4xf32>
    %193 = arith.mulf %184, %192 : vector<4x4xf32>
    %cst_55 = arith.constant dense<0.000000e+00> : vector<4xf32>
    %194 = vector.multi_reduction <add>, %193, %cst_55 [0] : vector<4x4xf32> to vector<4xf32>
    %195 = vector.shape_cast %194 : vector<4xf32> to vector<1x4xf32>
    %cst_56 = arith.constant 2.500000e-01 : f32
    %196 = vector.broadcast %cst_56 : f32 to vector<1x4xf32>
    %197 = arith.subf %195, %196 : vector<1x4xf32>
    %198 = math.absf %197 : vector<1x4xf32>
    %199 = vector.shape_cast %198 : vector<1x4xf32> to vector<1x1x4xf32>
    %cst_57 = arith.constant dense<0xFF800000> : vector<1xf32>
    %200 = vector.multi_reduction <maximumf>, %199, %cst_57 [1, 2] : vector<1x1x4xf32> to vector<1xf32>
    %201 = vector.shape_cast %200 : vector<1xf32> to vector<1x1x1xf32>
    %202 = vector.extract %201[0, 0, 0] : f32 from vector<1x1x1xf32>
    %cst_58 = arith.constant 9.99999997E-7 : f32
    %203 = arith.cmpf ole, %202, %cst_58 : f32
    %204 = arith.extui %203 : i1 to i32
    %205 = arith.sitofp %204 : i32 to f32
    %206 = tpu.reciprocal %195 {approx = true} : vector<1x4xf32> -> vector<1x4xf32>
    %cst_59 = arith.constant 2.500000e-01 : f32
    %207 = vector.broadcast %cst_59 : f32 to vector<1x4xf32>
    %208 = arith.mulf %206, %207 : vector<1x4xf32>
    %209 = vector.broadcast %208 : vector<1x4xf32> to vector<4x4xf32>
    %210 = arith.mulf %193, %209 : vector<4x4xf32>
    %211 = vector.broadcast %205 : f32 to vector<4x4xf32>
    %212 = arith.mulf %211, %193 : vector<4x4xf32>
    %cst_60 = arith.constant 1.000000e+00 : f32
    %213 = arith.subf %cst_60, %205 : f32
    %214 = vector.broadcast %213 : f32 to vector<4x4xf32>
    %215 = arith.mulf %214, %210 : vector<4x4xf32>
    %216 = arith.addf %212, %215 : vector<4x4xf32>
    %217 = vector.broadcast %186 : f32 to vector<4x4xf32>
    %218 = arith.mulf %217, %216 : vector<4x4xf32>
    %cst_61 = arith.constant 1.000000e+00 : f32
    %219 = arith.subf %cst_61, %186 : f32
    %220 = vector.broadcast %219 : f32 to vector<4x4xf32>
    %221 = arith.mulf %220, %184 : vector<4x4xf32>
    %222 = arith.addf %218, %221 : vector<4x4xf32>
    %cst_62 = arith.constant 1.000000e+00 : f32
    %223 = arith.subf %cst_62, %205 : f32
    %224 = arith.mulf %186, %223 : f32
    %c5_i32 = arith.constant 5 : i32
    %cst_63 = arith.constant dense<0.000000e+00> : vector<4xf32>
    %225 = vector.multi_reduction <add>, %222, %cst_63 [1] : vector<4x4xf32> to vector<4xf32>
    %226 = vector.shape_cast %225 : vector<4xf32> to vector<4x1xf32>
    %227 = tpu.reciprocal %226 {approx = true} : vector<4x1xf32> -> vector<4x1xf32>
    %cst_64 = arith.constant 2.500000e-01 : f32
    %228 = vector.broadcast %cst_64 : f32 to vector<4x1xf32>
    %229 = arith.mulf %227, %228 : vector<4x1xf32>
    %230 = vector.broadcast %229 : vector<4x1xf32> to vector<4x4xf32>
    %231 = arith.mulf %222, %230 : vector<4x4xf32>
    %cst_65 = arith.constant dense<0.000000e+00> : vector<4xf32>
    %232 = vector.multi_reduction <add>, %231, %cst_65 [0] : vector<4x4xf32> to vector<4xf32>
    %233 = vector.shape_cast %232 : vector<4xf32> to vector<1x4xf32>
    %cst_66 = arith.constant 2.500000e-01 : f32
    %234 = vector.broadcast %cst_66 : f32 to vector<1x4xf32>
    %235 = arith.subf %233, %234 : vector<1x4xf32>
    %236 = math.absf %235 : vector<1x4xf32>
    %237 = vector.shape_cast %236 : vector<1x4xf32> to vector<1x1x4xf32>
    %cst_67 = arith.constant dense<0xFF800000> : vector<1xf32>
    %238 = vector.multi_reduction <maximumf>, %237, %cst_67 [1, 2] : vector<1x1x4xf32> to vector<1xf32>
    %239 = vector.shape_cast %238 : vector<1xf32> to vector<1x1x1xf32>
    %240 = vector.extract %239[0, 0, 0] : f32 from vector<1x1x1xf32>
    %cst_68 = arith.constant 9.99999997E-7 : f32
    %241 = arith.cmpf ole, %240, %cst_68 : f32
    %242 = arith.extui %241 : i1 to i32
    %243 = arith.sitofp %242 : i32 to f32
    %244 = tpu.reciprocal %233 {approx = true} : vector<1x4xf32> -> vector<1x4xf32>
    %cst_69 = arith.constant 2.500000e-01 : f32
    %245 = vector.broadcast %cst_69 : f32 to vector<1x4xf32>
    %246 = arith.mulf %244, %245 : vector<1x4xf32>
    %247 = vector.broadcast %246 : vector<1x4xf32> to vector<4x4xf32>
    %248 = arith.mulf %231, %247 : vector<4x4xf32>
    %249 = vector.broadcast %243 : f32 to vector<4x4xf32>
    %250 = arith.mulf %249, %231 : vector<4x4xf32>
    %cst_70 = arith.constant 1.000000e+00 : f32
    %251 = arith.subf %cst_70, %243 : f32
    %252 = vector.broadcast %251 : f32 to vector<4x4xf32>
    %253 = arith.mulf %252, %248 : vector<4x4xf32>
    %254 = arith.addf %250, %253 : vector<4x4xf32>
    %255 = vector.broadcast %224 : f32 to vector<4x4xf32>
    %256 = arith.mulf %255, %254 : vector<4x4xf32>
    %cst_71 = arith.constant 1.000000e+00 : f32
    %257 = arith.subf %cst_71, %224 : f32
    %258 = vector.broadcast %257 : f32 to vector<4x4xf32>
    %259 = arith.mulf %258, %222 : vector<4x4xf32>
    %260 = arith.addf %256, %259 : vector<4x4xf32>
    %cst_72 = arith.constant 1.000000e+00 : f32
    %261 = arith.subf %cst_72, %243 : f32
    %262 = arith.mulf %224, %261 : f32
    %c6_i32 = arith.constant 6 : i32
    %cst_73 = arith.constant dense<0.000000e+00> : vector<4xf32>
    %263 = vector.multi_reduction <add>, %260, %cst_73 [1] : vector<4x4xf32> to vector<4xf32>
    %264 = vector.shape_cast %263 : vector<4xf32> to vector<4x1xf32>
    %265 = tpu.reciprocal %264 {approx = true} : vector<4x1xf32> -> vector<4x1xf32>
    %cst_74 = arith.constant 2.500000e-01 : f32
    %266 = vector.broadcast %cst_74 : f32 to vector<4x1xf32>
    %267 = arith.mulf %265, %266 : vector<4x1xf32>
    %268 = vector.broadcast %267 : vector<4x1xf32> to vector<4x4xf32>
    %269 = arith.mulf %260, %268 : vector<4x4xf32>
    %cst_75 = arith.constant dense<0.000000e+00> : vector<4xf32>
    %270 = vector.multi_reduction <add>, %269, %cst_75 [0] : vector<4x4xf32> to vector<4xf32>
    %271 = vector.shape_cast %270 : vector<4xf32> to vector<1x4xf32>
    %cst_76 = arith.constant 2.500000e-01 : f32
    %272 = vector.broadcast %cst_76 : f32 to vector<1x4xf32>
    %273 = arith.subf %271, %272 : vector<1x4xf32>
    %274 = math.absf %273 : vector<1x4xf32>
    %275 = vector.shape_cast %274 : vector<1x4xf32> to vector<1x1x4xf32>
    %cst_77 = arith.constant dense<0xFF800000> : vector<1xf32>
    %276 = vector.multi_reduction <maximumf>, %275, %cst_77 [1, 2] : vector<1x1x4xf32> to vector<1xf32>
    %277 = vector.shape_cast %276 : vector<1xf32> to vector<1x1x1xf32>
    %278 = vector.extract %277[0, 0, 0] : f32 from vector<1x1x1xf32>
    %cst_78 = arith.constant 9.99999997E-7 : f32
    %279 = arith.cmpf ole, %278, %cst_78 : f32
    %280 = arith.extui %279 : i1 to i32
    %281 = arith.sitofp %280 : i32 to f32
    %282 = tpu.reciprocal %271 {approx = true} : vector<1x4xf32> -> vector<1x4xf32>
    %cst_79 = arith.constant 2.500000e-01 : f32
    %283 = vector.broadcast %cst_79 : f32 to vector<1x4xf32>
    %284 = arith.mulf %282, %283 : vector<1x4xf32>
    %285 = vector.broadcast %284 : vector<1x4xf32> to vector<4x4xf32>
    %286 = arith.mulf %269, %285 : vector<4x4xf32>
    %287 = vector.broadcast %281 : f32 to vector<4x4xf32>
    %288 = arith.mulf %287, %269 : vector<4x4xf32>
    %cst_80 = arith.constant 1.000000e+00 : f32
    %289 = arith.subf %cst_80, %281 : f32
    %290 = vector.broadcast %289 : f32 to vector<4x4xf32>
    %291 = arith.mulf %290, %286 : vector<4x4xf32>
    %292 = arith.addf %288, %291 : vector<4x4xf32>
    %293 = vector.broadcast %262 : f32 to vector<4x4xf32>
    %294 = arith.mulf %293, %292 : vector<4x4xf32>
    %cst_81 = arith.constant 1.000000e+00 : f32
    %295 = arith.subf %cst_81, %262 : f32
    %296 = vector.broadcast %295 : f32 to vector<4x4xf32>
    %297 = arith.mulf %296, %260 : vector<4x4xf32>
    %298 = arith.addf %294, %297 : vector<4x4xf32>
    %cst_82 = arith.constant 1.000000e+00 : f32
    %299 = arith.subf %cst_82, %281 : f32
    %300 = arith.mulf %262, %299 : f32
    %c7_i32 = arith.constant 7 : i32
    %cst_83 = arith.constant dense<0.000000e+00> : vector<4xf32>
    %301 = vector.multi_reduction <add>, %298, %cst_83 [1] : vector<4x4xf32> to vector<4xf32>
    %302 = vector.shape_cast %301 : vector<4xf32> to vector<4x1xf32>
    %303 = tpu.reciprocal %302 {approx = true} : vector<4x1xf32> -> vector<4x1xf32>
    %cst_84 = arith.constant 2.500000e-01 : f32
    %304 = vector.broadcast %cst_84 : f32 to vector<4x1xf32>
    %305 = arith.mulf %303, %304 : vector<4x1xf32>
    %306 = vector.broadcast %305 : vector<4x1xf32> to vector<4x4xf32>
    %307 = arith.mulf %298, %306 : vector<4x4xf32>
    %cst_85 = arith.constant dense<0.000000e+00> : vector<4xf32>
    %308 = vector.multi_reduction <add>, %307, %cst_85 [0] : vector<4x4xf32> to vector<4xf32>
    %309 = vector.shape_cast %308 : vector<4xf32> to vector<1x4xf32>
    %cst_86 = arith.constant 2.500000e-01 : f32
    %310 = vector.broadcast %cst_86 : f32 to vector<1x4xf32>
    %311 = arith.subf %309, %310 : vector<1x4xf32>
    %312 = math.absf %311 : vector<1x4xf32>
    %313 = vector.shape_cast %312 : vector<1x4xf32> to vector<1x1x4xf32>
    %cst_87 = arith.constant dense<0xFF800000> : vector<1xf32>
    %314 = vector.multi_reduction <maximumf>, %313, %cst_87 [1, 2] : vector<1x1x4xf32> to vector<1xf32>
    %315 = vector.shape_cast %314 : vector<1xf32> to vector<1x1x1xf32>
    %316 = vector.extract %315[0, 0, 0] : f32 from vector<1x1x1xf32>
    %cst_88 = arith.constant 9.99999997E-7 : f32
    %317 = arith.cmpf ole, %316, %cst_88 : f32
    %318 = arith.extui %317 : i1 to i32
    %319 = arith.sitofp %318 : i32 to f32
    %320 = tpu.reciprocal %309 {approx = true} : vector<1x4xf32> -> vector<1x4xf32>
    %cst_89 = arith.constant 2.500000e-01 : f32
    %321 = vector.broadcast %cst_89 : f32 to vector<1x4xf32>
    %322 = arith.mulf %320, %321 : vector<1x4xf32>
    %323 = vector.broadcast %322 : vector<1x4xf32> to vector<4x4xf32>
    %324 = arith.mulf %307, %323 : vector<4x4xf32>
    %325 = vector.broadcast %319 : f32 to vector<4x4xf32>
    %326 = arith.mulf %325, %307 : vector<4x4xf32>
    %cst_90 = arith.constant 1.000000e+00 : f32
    %327 = arith.subf %cst_90, %319 : f32
    %328 = vector.broadcast %327 : f32 to vector<4x4xf32>
    %329 = arith.mulf %328, %324 : vector<4x4xf32>
    %330 = arith.addf %326, %329 : vector<4x4xf32>
    %331 = vector.broadcast %300 : f32 to vector<4x4xf32>
    %332 = arith.mulf %331, %330 : vector<4x4xf32>
    %cst_91 = arith.constant 1.000000e+00 : f32
    %333 = arith.subf %cst_91, %300 : f32
    %334 = vector.broadcast %333 : f32 to vector<4x4xf32>
    %335 = arith.mulf %334, %298 : vector<4x4xf32>
    %336 = arith.addf %332, %335 : vector<4x4xf32>
    %cst_92 = arith.constant 1.000000e+00 : f32
    %337 = arith.subf %cst_92, %319 : f32
    %338 = arith.mulf %300, %337 : f32
    %c8_i32 = arith.constant 8 : i32
    %cst_93 = arith.constant dense<0.000000e+00> : vector<4xf32>
    %339 = vector.multi_reduction <add>, %336, %cst_93 [1] : vector<4x4xf32> to vector<4xf32>
    %340 = vector.shape_cast %339 : vector<4xf32> to vector<4x1xf32>
    %341 = tpu.reciprocal %340 {approx = true} : vector<4x1xf32> -> vector<4x1xf32>
    %cst_94 = arith.constant 2.500000e-01 : f32
    %342 = vector.broadcast %cst_94 : f32 to vector<4x1xf32>
    %343 = arith.mulf %341, %342 : vector<4x1xf32>
    %344 = vector.broadcast %343 : vector<4x1xf32> to vector<4x4xf32>
    %345 = arith.mulf %336, %344 : vector<4x4xf32>
    %cst_95 = arith.constant dense<0.000000e+00> : vector<4xf32>
    %346 = vector.multi_reduction <add>, %345, %cst_95 [0] : vector<4x4xf32> to vector<4xf32>
    %347 = vector.shape_cast %346 : vector<4xf32> to vector<1x4xf32>
    %cst_96 = arith.constant 2.500000e-01 : f32
    %348 = vector.broadcast %cst_96 : f32 to vector<1x4xf32>
    %349 = arith.subf %347, %348 : vector<1x4xf32>
    %350 = math.absf %349 : vector<1x4xf32>
    %351 = vector.shape_cast %350 : vector<1x4xf32> to vector<1x1x4xf32>
    %cst_97 = arith.constant dense<0xFF800000> : vector<1xf32>
    %352 = vector.multi_reduction <maximumf>, %351, %cst_97 [1, 2] : vector<1x1x4xf32> to vector<1xf32>
    %353 = vector.shape_cast %352 : vector<1xf32> to vector<1x1x1xf32>
    %354 = vector.extract %353[0, 0, 0] : f32 from vector<1x1x1xf32>
    %cst_98 = arith.constant 9.99999997E-7 : f32
    %355 = arith.cmpf ole, %354, %cst_98 : f32
    %356 = arith.extui %355 : i1 to i32
    %357 = arith.sitofp %356 : i32 to f32
    %358 = tpu.reciprocal %347 {approx = true} : vector<1x4xf32> -> vector<1x4xf32>
    %cst_99 = arith.constant 2.500000e-01 : f32
    %359 = vector.broadcast %cst_99 : f32 to vector<1x4xf32>
    %360 = arith.mulf %358, %359 : vector<1x4xf32>
    %361 = vector.broadcast %360 : vector<1x4xf32> to vector<4x4xf32>
    %362 = arith.mulf %345, %361 : vector<4x4xf32>
    %363 = vector.broadcast %357 : f32 to vector<4x4xf32>
    %364 = arith.mulf %363, %345 : vector<4x4xf32>
    %cst_100 = arith.constant 1.000000e+00 : f32
    %365 = arith.subf %cst_100, %357 : f32
    %366 = vector.broadcast %365 : f32 to vector<4x4xf32>
    %367 = arith.mulf %366, %362 : vector<4x4xf32>
    %368 = arith.addf %364, %367 : vector<4x4xf32>
    %369 = vector.broadcast %338 : f32 to vector<4x4xf32>
    %370 = arith.mulf %369, %368 : vector<4x4xf32>
    %cst_101 = arith.constant 1.000000e+00 : f32
    %371 = arith.subf %cst_101, %338 : f32
    %372 = vector.broadcast %371 : f32 to vector<4x4xf32>
    %373 = arith.mulf %372, %336 : vector<4x4xf32>
    %374 = arith.addf %370, %373 : vector<4x4xf32>
    %cst_102 = arith.constant 1.000000e+00 : f32
    %375 = arith.subf %cst_102, %357 : f32
    %376 = arith.mulf %338, %375 : f32
    %c9_i32 = arith.constant 9 : i32
    %cst_103 = arith.constant dense<0.000000e+00> : vector<4xf32>
    %377 = vector.multi_reduction <add>, %374, %cst_103 [1] : vector<4x4xf32> to vector<4xf32>
    %378 = vector.shape_cast %377 : vector<4xf32> to vector<4x1xf32>
    %379 = tpu.reciprocal %378 {approx = true} : vector<4x1xf32> -> vector<4x1xf32>
    %cst_104 = arith.constant 2.500000e-01 : f32
    %380 = vector.broadcast %cst_104 : f32 to vector<4x1xf32>
    %381 = arith.mulf %379, %380 : vector<4x1xf32>
    %382 = vector.broadcast %381 : vector<4x1xf32> to vector<4x4xf32>
    %383 = arith.mulf %374, %382 : vector<4x4xf32>
    %cst_105 = arith.constant dense<0.000000e+00> : vector<4xf32>
    %384 = vector.multi_reduction <add>, %383, %cst_105 [0] : vector<4x4xf32> to vector<4xf32>
    %385 = vector.shape_cast %384 : vector<4xf32> to vector<1x4xf32>
    %cst_106 = arith.constant 2.500000e-01 : f32
    %386 = vector.broadcast %cst_106 : f32 to vector<1x4xf32>
    %387 = arith.subf %385, %386 : vector<1x4xf32>
    %388 = math.absf %387 : vector<1x4xf32>
    %389 = vector.shape_cast %388 : vector<1x4xf32> to vector<1x1x4xf32>
    %cst_107 = arith.constant dense<0xFF800000> : vector<1xf32>
    %390 = vector.multi_reduction <maximumf>, %389, %cst_107 [1, 2] : vector<1x1x4xf32> to vector<1xf32>
    %391 = vector.shape_cast %390 : vector<1xf32> to vector<1x1x1xf32>
    %392 = vector.extract %391[0, 0, 0] : f32 from vector<1x1x1xf32>
    %cst_108 = arith.constant 9.99999997E-7 : f32
    %393 = arith.cmpf ole, %392, %cst_108 : f32
    %394 = arith.extui %393 : i1 to i32
    %395 = arith.sitofp %394 : i32 to f32
    %396 = tpu.reciprocal %385 {approx = true} : vector<1x4xf32> -> vector<1x4xf32>
    %cst_109 = arith.constant 2.500000e-01 : f32
    %397 = vector.broadcast %cst_109 : f32 to vector<1x4xf32>
    %398 = arith.mulf %396, %397 : vector<1x4xf32>
    %399 = vector.broadcast %398 : vector<1x4xf32> to vector<4x4xf32>
    %400 = arith.mulf %383, %399 : vector<4x4xf32>
    %401 = vector.broadcast %395 : f32 to vector<4x4xf32>
    %402 = arith.mulf %401, %383 : vector<4x4xf32>
    %cst_110 = arith.constant 1.000000e+00 : f32
    %403 = arith.subf %cst_110, %395 : f32
    %404 = vector.broadcast %403 : f32 to vector<4x4xf32>
    %405 = arith.mulf %404, %400 : vector<4x4xf32>
    %406 = arith.addf %402, %405 : vector<4x4xf32>
    %407 = vector.broadcast %376 : f32 to vector<4x4xf32>
    %408 = arith.mulf %407, %406 : vector<4x4xf32>
    %cst_111 = arith.constant 1.000000e+00 : f32
    %409 = arith.subf %cst_111, %376 : f32
    %410 = vector.broadcast %409 : f32 to vector<4x4xf32>
    %411 = arith.mulf %410, %374 : vector<4x4xf32>
    %412 = arith.addf %408, %411 : vector<4x4xf32>
    %cst_112 = arith.constant 1.000000e+00 : f32
    %413 = arith.subf %cst_112, %395 : f32
    %414 = arith.mulf %376, %413 : f32
    %c10_i32 = arith.constant 10 : i32
    %cst_113 = arith.constant dense<0.000000e+00> : vector<4xf32>
    %415 = vector.multi_reduction <add>, %412, %cst_113 [1] : vector<4x4xf32> to vector<4xf32>
    %416 = vector.shape_cast %415 : vector<4xf32> to vector<4x1xf32>
    %417 = tpu.reciprocal %416 {approx = true} : vector<4x1xf32> -> vector<4x1xf32>
    %cst_114 = arith.constant 2.500000e-01 : f32
    %418 = vector.broadcast %cst_114 : f32 to vector<4x1xf32>
    %419 = arith.mulf %417, %418 : vector<4x1xf32>
    %420 = vector.broadcast %419 : vector<4x1xf32> to vector<4x4xf32>
    %421 = arith.mulf %412, %420 : vector<4x4xf32>
    %cst_115 = arith.constant dense<0.000000e+00> : vector<4xf32>
    %422 = vector.multi_reduction <add>, %421, %cst_115 [0] : vector<4x4xf32> to vector<4xf32>
    %423 = vector.shape_cast %422 : vector<4xf32> to vector<1x4xf32>
    %cst_116 = arith.constant 2.500000e-01 : f32
    %424 = vector.broadcast %cst_116 : f32 to vector<1x4xf32>
    %425 = arith.subf %423, %424 : vector<1x4xf32>
    %426 = math.absf %425 : vector<1x4xf32>
    %427 = vector.shape_cast %426 : vector<1x4xf32> to vector<1x1x4xf32>
    %cst_117 = arith.constant dense<0xFF800000> : vector<1xf32>
    %428 = vector.multi_reduction <maximumf>, %427, %cst_117 [1, 2] : vector<1x1x4xf32> to vector<1xf32>
    %429 = vector.shape_cast %428 : vector<1xf32> to vector<1x1x1xf32>
    %430 = vector.extract %429[0, 0, 0] : f32 from vector<1x1x1xf32>
    %cst_118 = arith.constant 9.99999997E-7 : f32
    %431 = arith.cmpf ole, %430, %cst_118 : f32
    %432 = arith.extui %431 : i1 to i32
    %433 = arith.sitofp %432 : i32 to f32
    %434 = tpu.reciprocal %423 {approx = true} : vector<1x4xf32> -> vector<1x4xf32>
    %cst_119 = arith.constant 2.500000e-01 : f32
    %435 = vector.broadcast %cst_119 : f32 to vector<1x4xf32>
    %436 = arith.mulf %434, %435 : vector<1x4xf32>
    %437 = vector.broadcast %436 : vector<1x4xf32> to vector<4x4xf32>
    %438 = arith.mulf %421, %437 : vector<4x4xf32>
    %439 = vector.broadcast %433 : f32 to vector<4x4xf32>
    %440 = arith.mulf %439, %421 : vector<4x4xf32>
    %cst_120 = arith.constant 1.000000e+00 : f32
    %441 = arith.subf %cst_120, %433 : f32
    %442 = vector.broadcast %441 : f32 to vector<4x4xf32>
    %443 = arith.mulf %442, %438 : vector<4x4xf32>
    %444 = arith.addf %440, %443 : vector<4x4xf32>
    %445 = vector.broadcast %414 : f32 to vector<4x4xf32>
    %446 = arith.mulf %445, %444 : vector<4x4xf32>
    %cst_121 = arith.constant 1.000000e+00 : f32
    %447 = arith.subf %cst_121, %414 : f32
    %448 = vector.broadcast %447 : f32 to vector<4x4xf32>
    %449 = arith.mulf %448, %412 : vector<4x4xf32>
    %450 = arith.addf %446, %449 : vector<4x4xf32>
    %cst_122 = arith.constant 1.000000e+00 : f32
    %451 = arith.subf %cst_122, %433 : f32
    %452 = arith.mulf %414, %451 : f32
    %c11_i32 = arith.constant 11 : i32
    %cst_123 = arith.constant dense<0.000000e+00> : vector<4xf32>
    %453 = vector.multi_reduction <add>, %450, %cst_123 [1] : vector<4x4xf32> to vector<4xf32>
    %454 = vector.shape_cast %453 : vector<4xf32> to vector<4x1xf32>
    %455 = tpu.reciprocal %454 {approx = true} : vector<4x1xf32> -> vector<4x1xf32>
    %cst_124 = arith.constant 2.500000e-01 : f32
    %456 = vector.broadcast %cst_124 : f32 to vector<4x1xf32>
    %457 = arith.mulf %455, %456 : vector<4x1xf32>
    %458 = vector.broadcast %457 : vector<4x1xf32> to vector<4x4xf32>
    %459 = arith.mulf %450, %458 : vector<4x4xf32>
    %cst_125 = arith.constant dense<0.000000e+00> : vector<4xf32>
    %460 = vector.multi_reduction <add>, %459, %cst_125 [0] : vector<4x4xf32> to vector<4xf32>
    %461 = vector.shape_cast %460 : vector<4xf32> to vector<1x4xf32>
    %cst_126 = arith.constant 2.500000e-01 : f32
    %462 = vector.broadcast %cst_126 : f32 to vector<1x4xf32>
    %463 = arith.subf %461, %462 : vector<1x4xf32>
    %464 = math.absf %463 : vector<1x4xf32>
    %465 = vector.shape_cast %464 : vector<1x4xf32> to vector<1x1x4xf32>
    %cst_127 = arith.constant dense<0xFF800000> : vector<1xf32>
    %466 = vector.multi_reduction <maximumf>, %465, %cst_127 [1, 2] : vector<1x1x4xf32> to vector<1xf32>
    %467 = vector.shape_cast %466 : vector<1xf32> to vector<1x1x1xf32>
    %468 = vector.extract %467[0, 0, 0] : f32 from vector<1x1x1xf32>
    %cst_128 = arith.constant 9.99999997E-7 : f32
    %469 = arith.cmpf ole, %468, %cst_128 : f32
    %470 = arith.extui %469 : i1 to i32
    %471 = arith.sitofp %470 : i32 to f32
    %472 = tpu.reciprocal %461 {approx = true} : vector<1x4xf32> -> vector<1x4xf32>
    %cst_129 = arith.constant 2.500000e-01 : f32
    %473 = vector.broadcast %cst_129 : f32 to vector<1x4xf32>
    %474 = arith.mulf %472, %473 : vector<1x4xf32>
    %475 = vector.broadcast %474 : vector<1x4xf32> to vector<4x4xf32>
    %476 = arith.mulf %459, %475 : vector<4x4xf32>
    %477 = vector.broadcast %471 : f32 to vector<4x4xf32>
    %478 = arith.mulf %477, %459 : vector<4x4xf32>
    %cst_130 = arith.constant 1.000000e+00 : f32
    %479 = arith.subf %cst_130, %471 : f32
    %480 = vector.broadcast %479 : f32 to vector<4x4xf32>
    %481 = arith.mulf %480, %476 : vector<4x4xf32>
    %482 = arith.addf %478, %481 : vector<4x4xf32>
    %483 = vector.broadcast %452 : f32 to vector<4x4xf32>
    %484 = arith.mulf %483, %482 : vector<4x4xf32>
    %cst_131 = arith.constant 1.000000e+00 : f32
    %485 = arith.subf %cst_131, %452 : f32
    %486 = vector.broadcast %485 : f32 to vector<4x4xf32>
    %487 = arith.mulf %486, %450 : vector<4x4xf32>
    %488 = arith.addf %484, %487 : vector<4x4xf32>
    %cst_132 = arith.constant 1.000000e+00 : f32
    %489 = arith.subf %cst_132, %471 : f32
    %490 = arith.mulf %452, %489 : f32
    %c12_i32 = arith.constant 12 : i32
    %cst_133 = arith.constant dense<0.000000e+00> : vector<4xf32>
    %491 = vector.multi_reduction <add>, %488, %cst_133 [1] : vector<4x4xf32> to vector<4xf32>
    %492 = vector.shape_cast %491 : vector<4xf32> to vector<4x1xf32>
    %493 = tpu.reciprocal %492 {approx = true} : vector<4x1xf32> -> vector<4x1xf32>
    %cst_134 = arith.constant 2.500000e-01 : f32
    %494 = vector.broadcast %cst_134 : f32 to vector<4x1xf32>
    %495 = arith.mulf %493, %494 : vector<4x1xf32>
    %496 = vector.broadcast %495 : vector<4x1xf32> to vector<4x4xf32>
    %497 = arith.mulf %488, %496 : vector<4x4xf32>
    %cst_135 = arith.constant dense<0.000000e+00> : vector<4xf32>
    %498 = vector.multi_reduction <add>, %497, %cst_135 [0] : vector<4x4xf32> to vector<4xf32>
    %499 = vector.shape_cast %498 : vector<4xf32> to vector<1x4xf32>
    %cst_136 = arith.constant 2.500000e-01 : f32
    %500 = vector.broadcast %cst_136 : f32 to vector<1x4xf32>
    %501 = arith.subf %499, %500 : vector<1x4xf32>
    %502 = math.absf %501 : vector<1x4xf32>
    %503 = vector.shape_cast %502 : vector<1x4xf32> to vector<1x1x4xf32>
    %cst_137 = arith.constant dense<0xFF800000> : vector<1xf32>
    %504 = vector.multi_reduction <maximumf>, %503, %cst_137 [1, 2] : vector<1x1x4xf32> to vector<1xf32>
    %505 = vector.shape_cast %504 : vector<1xf32> to vector<1x1x1xf32>
    %506 = vector.extract %505[0, 0, 0] : f32 from vector<1x1x1xf32>
    %cst_138 = arith.constant 9.99999997E-7 : f32
    %507 = arith.cmpf ole, %506, %cst_138 : f32
    %508 = arith.extui %507 : i1 to i32
    %509 = arith.sitofp %508 : i32 to f32
    %510 = tpu.reciprocal %499 {approx = true} : vector<1x4xf32> -> vector<1x4xf32>
    %cst_139 = arith.constant 2.500000e-01 : f32
    %511 = vector.broadcast %cst_139 : f32 to vector<1x4xf32>
    %512 = arith.mulf %510, %511 : vector<1x4xf32>
    %513 = vector.broadcast %512 : vector<1x4xf32> to vector<4x4xf32>
    %514 = arith.mulf %497, %513 : vector<4x4xf32>
    %515 = vector.broadcast %509 : f32 to vector<4x4xf32>
    %516 = arith.mulf %515, %497 : vector<4x4xf32>
    %cst_140 = arith.constant 1.000000e+00 : f32
    %517 = arith.subf %cst_140, %509 : f32
    %518 = vector.broadcast %517 : f32 to vector<4x4xf32>
    %519 = arith.mulf %518, %514 : vector<4x4xf32>
    %520 = arith.addf %516, %519 : vector<4x4xf32>
    %521 = vector.broadcast %490 : f32 to vector<4x4xf32>
    %522 = arith.mulf %521, %520 : vector<4x4xf32>
    %cst_141 = arith.constant 1.000000e+00 : f32
    %523 = arith.subf %cst_141, %490 : f32
    %524 = vector.broadcast %523 : f32 to vector<4x4xf32>
    %525 = arith.mulf %524, %488 : vector<4x4xf32>
    %526 = arith.addf %522, %525 : vector<4x4xf32>
    %cst_142 = arith.constant 1.000000e+00 : f32
    %527 = arith.subf %cst_142, %509 : f32
    %528 = arith.mulf %490, %527 : f32
    %c13_i32 = arith.constant 13 : i32
    %cst_143 = arith.constant dense<0.000000e+00> : vector<4xf32>
    %529 = vector.multi_reduction <add>, %526, %cst_143 [1] : vector<4x4xf32> to vector<4xf32>
    %530 = vector.shape_cast %529 : vector<4xf32> to vector<4x1xf32>
    %531 = tpu.reciprocal %530 {approx = true} : vector<4x1xf32> -> vector<4x1xf32>
    %cst_144 = arith.constant 2.500000e-01 : f32
    %532 = vector.broadcast %cst_144 : f32 to vector<4x1xf32>
    %533 = arith.mulf %531, %532 : vector<4x1xf32>
    %534 = vector.broadcast %533 : vector<4x1xf32> to vector<4x4xf32>
    %535 = arith.mulf %526, %534 : vector<4x4xf32>
    %cst_145 = arith.constant dense<0.000000e+00> : vector<4xf32>
    %536 = vector.multi_reduction <add>, %535, %cst_145 [0] : vector<4x4xf32> to vector<4xf32>
    %537 = vector.shape_cast %536 : vector<4xf32> to vector<1x4xf32>
    %cst_146 = arith.constant 2.500000e-01 : f32
    %538 = vector.broadcast %cst_146 : f32 to vector<1x4xf32>
    %539 = arith.subf %537, %538 : vector<1x4xf32>
    %540 = math.absf %539 : vector<1x4xf32>
    %541 = vector.shape_cast %540 : vector<1x4xf32> to vector<1x1x4xf32>
    %cst_147 = arith.constant dense<0xFF800000> : vector<1xf32>
    %542 = vector.multi_reduction <maximumf>, %541, %cst_147 [1, 2] : vector<1x1x4xf32> to vector<1xf32>
    %543 = vector.shape_cast %542 : vector<1xf32> to vector<1x1x1xf32>
    %544 = vector.extract %543[0, 0, 0] : f32 from vector<1x1x1xf32>
    %cst_148 = arith.constant 9.99999997E-7 : f32
    %545 = arith.cmpf ole, %544, %cst_148 : f32
    %546 = arith.extui %545 : i1 to i32
    %547 = arith.sitofp %546 : i32 to f32
    %548 = tpu.reciprocal %537 {approx = true} : vector<1x4xf32> -> vector<1x4xf32>
    %cst_149 = arith.constant 2.500000e-01 : f32
    %549 = vector.broadcast %cst_149 : f32 to vector<1x4xf32>
    %550 = arith.mulf %548, %549 : vector<1x4xf32>
    %551 = vector.broadcast %550 : vector<1x4xf32> to vector<4x4xf32>
    %552 = arith.mulf %535, %551 : vector<4x4xf32>
    %553 = vector.broadcast %547 : f32 to vector<4x4xf32>
    %554 = arith.mulf %553, %535 : vector<4x4xf32>
    %cst_150 = arith.constant 1.000000e+00 : f32
    %555 = arith.subf %cst_150, %547 : f32
    %556 = vector.broadcast %555 : f32 to vector<4x4xf32>
    %557 = arith.mulf %556, %552 : vector<4x4xf32>
    %558 = arith.addf %554, %557 : vector<4x4xf32>
    %559 = vector.broadcast %528 : f32 to vector<4x4xf32>
    %560 = arith.mulf %559, %558 : vector<4x4xf32>
    %cst_151 = arith.constant 1.000000e+00 : f32
    %561 = arith.subf %cst_151, %528 : f32
    %562 = vector.broadcast %561 : f32 to vector<4x4xf32>
    %563 = arith.mulf %562, %526 : vector<4x4xf32>
    %564 = arith.addf %560, %563 : vector<4x4xf32>
    %cst_152 = arith.constant 1.000000e+00 : f32
    %565 = arith.subf %cst_152, %547 : f32
    %566 = arith.mulf %528, %565 : f32
    %c14_i32 = arith.constant 14 : i32
    %cst_153 = arith.constant dense<0.000000e+00> : vector<4xf32>
    %567 = vector.multi_reduction <add>, %564, %cst_153 [1] : vector<4x4xf32> to vector<4xf32>
    %568 = vector.shape_cast %567 : vector<4xf32> to vector<4x1xf32>
    %569 = tpu.reciprocal %568 {approx = true} : vector<4x1xf32> -> vector<4x1xf32>
    %cst_154 = arith.constant 2.500000e-01 : f32
    %570 = vector.broadcast %cst_154 : f32 to vector<4x1xf32>
    %571 = arith.mulf %569, %570 : vector<4x1xf32>
    %572 = vector.broadcast %571 : vector<4x1xf32> to vector<4x4xf32>
    %573 = arith.mulf %564, %572 : vector<4x4xf32>
    %cst_155 = arith.constant dense<0.000000e+00> : vector<4xf32>
    %574 = vector.multi_reduction <add>, %573, %cst_155 [0] : vector<4x4xf32> to vector<4xf32>
    %575 = vector.shape_cast %574 : vector<4xf32> to vector<1x4xf32>
    %cst_156 = arith.constant 2.500000e-01 : f32
    %576 = vector.broadcast %cst_156 : f32 to vector<1x4xf32>
    %577 = arith.subf %575, %576 : vector<1x4xf32>
    %578 = math.absf %577 : vector<1x4xf32>
    %579 = vector.shape_cast %578 : vector<1x4xf32> to vector<1x1x4xf32>
    %cst_157 = arith.constant dense<0xFF800000> : vector<1xf32>
    %580 = vector.multi_reduction <maximumf>, %579, %cst_157 [1, 2] : vector<1x1x4xf32> to vector<1xf32>
    %581 = vector.shape_cast %580 : vector<1xf32> to vector<1x1x1xf32>
    %582 = vector.extract %581[0, 0, 0] : f32 from vector<1x1x1xf32>
    %cst_158 = arith.constant 9.99999997E-7 : f32
    %583 = arith.cmpf ole, %582, %cst_158 : f32
    %584 = arith.extui %583 : i1 to i32
    %585 = arith.sitofp %584 : i32 to f32
    %586 = tpu.reciprocal %575 {approx = true} : vector<1x4xf32> -> vector<1x4xf32>
    %cst_159 = arith.constant 2.500000e-01 : f32
    %587 = vector.broadcast %cst_159 : f32 to vector<1x4xf32>
    %588 = arith.mulf %586, %587 : vector<1x4xf32>
    %589 = vector.broadcast %588 : vector<1x4xf32> to vector<4x4xf32>
    %590 = arith.mulf %573, %589 : vector<4x4xf32>
    %591 = vector.broadcast %585 : f32 to vector<4x4xf32>
    %592 = arith.mulf %591, %573 : vector<4x4xf32>
    %cst_160 = arith.constant 1.000000e+00 : f32
    %593 = arith.subf %cst_160, %585 : f32
    %594 = vector.broadcast %593 : f32 to vector<4x4xf32>
    %595 = arith.mulf %594, %590 : vector<4x4xf32>
    %596 = arith.addf %592, %595 : vector<4x4xf32>
    %597 = vector.broadcast %566 : f32 to vector<4x4xf32>
    %598 = arith.mulf %597, %596 : vector<4x4xf32>
    %cst_161 = arith.constant 1.000000e+00 : f32
    %599 = arith.subf %cst_161, %566 : f32
    %600 = vector.broadcast %599 : f32 to vector<4x4xf32>
    %601 = arith.mulf %600, %564 : vector<4x4xf32>
    %602 = arith.addf %598, %601 : vector<4x4xf32>
    %cst_162 = arith.constant 1.000000e+00 : f32
    %603 = arith.subf %cst_162, %585 : f32
    %604 = arith.mulf %566, %603 : f32
    %c15_i32 = arith.constant 15 : i32
    %cst_163 = arith.constant dense<0.000000e+00> : vector<4xf32>
    %605 = vector.multi_reduction <add>, %602, %cst_163 [1] : vector<4x4xf32> to vector<4xf32>
    %606 = vector.shape_cast %605 : vector<4xf32> to vector<4x1xf32>
    %607 = tpu.reciprocal %606 {approx = true} : vector<4x1xf32> -> vector<4x1xf32>
    %cst_164 = arith.constant 2.500000e-01 : f32
    %608 = vector.broadcast %cst_164 : f32 to vector<4x1xf32>
    %609 = arith.mulf %607, %608 : vector<4x1xf32>
    %610 = vector.broadcast %609 : vector<4x1xf32> to vector<4x4xf32>
    %611 = arith.mulf %602, %610 : vector<4x4xf32>
    %cst_165 = arith.constant dense<0.000000e+00> : vector<4xf32>
    %612 = vector.multi_reduction <add>, %611, %cst_165 [0] : vector<4x4xf32> to vector<4xf32>
    %613 = vector.shape_cast %612 : vector<4xf32> to vector<1x4xf32>
    %cst_166 = arith.constant 2.500000e-01 : f32
    %614 = vector.broadcast %cst_166 : f32 to vector<1x4xf32>
    %615 = arith.subf %613, %614 : vector<1x4xf32>
    %616 = math.absf %615 : vector<1x4xf32>
    %617 = vector.shape_cast %616 : vector<1x4xf32> to vector<1x1x4xf32>
    %cst_167 = arith.constant dense<0xFF800000> : vector<1xf32>
    %618 = vector.multi_reduction <maximumf>, %617, %cst_167 [1, 2] : vector<1x1x4xf32> to vector<1xf32>
    %619 = vector.shape_cast %618 : vector<1xf32> to vector<1x1x1xf32>
    %620 = vector.extract %619[0, 0, 0] : f32 from vector<1x1x1xf32>
    %cst_168 = arith.constant 9.99999997E-7 : f32
    %621 = arith.cmpf ole, %620, %cst_168 : f32
    %622 = arith.extui %621 : i1 to i32
    %623 = arith.sitofp %622 : i32 to f32
    %624 = tpu.reciprocal %613 {approx = true} : vector<1x4xf32> -> vector<1x4xf32>
    %cst_169 = arith.constant 2.500000e-01 : f32
    %625 = vector.broadcast %cst_169 : f32 to vector<1x4xf32>
    %626 = arith.mulf %624, %625 : vector<1x4xf32>
    %627 = vector.broadcast %626 : vector<1x4xf32> to vector<4x4xf32>
    %628 = arith.mulf %611, %627 : vector<4x4xf32>
    %629 = vector.broadcast %623 : f32 to vector<4x4xf32>
    %630 = arith.mulf %629, %611 : vector<4x4xf32>
    %cst_170 = arith.constant 1.000000e+00 : f32
    %631 = arith.subf %cst_170, %623 : f32
    %632 = vector.broadcast %631 : f32 to vector<4x4xf32>
    %633 = arith.mulf %632, %628 : vector<4x4xf32>
    %634 = arith.addf %630, %633 : vector<4x4xf32>
    %635 = vector.broadcast %604 : f32 to vector<4x4xf32>
    %636 = arith.mulf %635, %634 : vector<4x4xf32>
    %cst_171 = arith.constant 1.000000e+00 : f32
    %637 = arith.subf %cst_171, %604 : f32
    %638 = vector.broadcast %637 : f32 to vector<4x4xf32>
    %639 = arith.mulf %638, %602 : vector<4x4xf32>
    %640 = arith.addf %636, %639 : vector<4x4xf32>
    %cst_172 = arith.constant 1.000000e+00 : f32
    %641 = arith.subf %cst_172, %623 : f32
    %642 = arith.mulf %604, %641 : f32
    %c16_i32 = arith.constant 16 : i32
    %cst_173 = arith.constant dense<0.000000e+00> : vector<4xf32>
    %643 = vector.multi_reduction <add>, %640, %cst_173 [1] : vector<4x4xf32> to vector<4xf32>
    %644 = vector.shape_cast %643 : vector<4xf32> to vector<4x1xf32>
    %645 = tpu.reciprocal %644 {approx = true} : vector<4x1xf32> -> vector<4x1xf32>
    %cst_174 = arith.constant 2.500000e-01 : f32
    %646 = vector.broadcast %cst_174 : f32 to vector<4x1xf32>
    %647 = arith.mulf %645, %646 : vector<4x1xf32>
    %648 = vector.broadcast %647 : vector<4x1xf32> to vector<4x4xf32>
    %649 = arith.mulf %640, %648 : vector<4x4xf32>
    %cst_175 = arith.constant dense<0.000000e+00> : vector<4xf32>
    %650 = vector.multi_reduction <add>, %649, %cst_175 [0] : vector<4x4xf32> to vector<4xf32>
    %651 = vector.shape_cast %650 : vector<4xf32> to vector<1x4xf32>
    %cst_176 = arith.constant 2.500000e-01 : f32
    %652 = vector.broadcast %cst_176 : f32 to vector<1x4xf32>
    %653 = arith.subf %651, %652 : vector<1x4xf32>
    %654 = math.absf %653 : vector<1x4xf32>
    %655 = vector.shape_cast %654 : vector<1x4xf32> to vector<1x1x4xf32>
    %cst_177 = arith.constant dense<0xFF800000> : vector<1xf32>
    %656 = vector.multi_reduction <maximumf>, %655, %cst_177 [1, 2] : vector<1x1x4xf32> to vector<1xf32>
    %657 = vector.shape_cast %656 : vector<1xf32> to vector<1x1x1xf32>
    %658 = vector.extract %657[0, 0, 0] : f32 from vector<1x1x1xf32>
    %cst_178 = arith.constant 9.99999997E-7 : f32
    %659 = arith.cmpf ole, %658, %cst_178 : f32
    %660 = arith.extui %659 : i1 to i32
    %661 = arith.sitofp %660 : i32 to f32
    %662 = tpu.reciprocal %651 {approx = true} : vector<1x4xf32> -> vector<1x4xf32>
    %cst_179 = arith.constant 2.500000e-01 : f32
    %663 = vector.broadcast %cst_179 : f32 to vector<1x4xf32>
    %664 = arith.mulf %662, %663 : vector<1x4xf32>
    %665 = vector.broadcast %664 : vector<1x4xf32> to vector<4x4xf32>
    %666 = arith.mulf %649, %665 : vector<4x4xf32>
    %667 = vector.broadcast %661 : f32 to vector<4x4xf32>
    %668 = arith.mulf %667, %649 : vector<4x4xf32>
    %cst_180 = arith.constant 1.000000e+00 : f32
    %669 = arith.subf %cst_180, %661 : f32
    %670 = vector.broadcast %669 : f32 to vector<4x4xf32>
    %671 = arith.mulf %670, %666 : vector<4x4xf32>
    %672 = arith.addf %668, %671 : vector<4x4xf32>
    %673 = vector.broadcast %642 : f32 to vector<4x4xf32>
    %674 = arith.mulf %673, %672 : vector<4x4xf32>
    %cst_181 = arith.constant 1.000000e+00 : f32
    %675 = arith.subf %cst_181, %642 : f32
    %676 = vector.broadcast %675 : f32 to vector<4x4xf32>
    %677 = arith.mulf %676, %640 : vector<4x4xf32>
    %678 = arith.addf %674, %677 : vector<4x4xf32>
    %cst_182 = arith.constant 1.000000e+00 : f32
    %679 = arith.subf %cst_182, %661 : f32
    %680 = arith.mulf %642, %679 : f32
    %c17_i32 = arith.constant 17 : i32
    %cst_183 = arith.constant dense<0.000000e+00> : vector<4xf32>
    %681 = vector.multi_reduction <add>, %678, %cst_183 [1] : vector<4x4xf32> to vector<4xf32>
    %682 = vector.shape_cast %681 : vector<4xf32> to vector<4x1xf32>
    %683 = tpu.reciprocal %682 {approx = true} : vector<4x1xf32> -> vector<4x1xf32>
    %cst_184 = arith.constant 2.500000e-01 : f32
    %684 = vector.broadcast %cst_184 : f32 to vector<4x1xf32>
    %685 = arith.mulf %683, %684 : vector<4x1xf32>
    %686 = vector.broadcast %685 : vector<4x1xf32> to vector<4x4xf32>
    %687 = arith.mulf %678, %686 : vector<4x4xf32>
    %cst_185 = arith.constant dense<0.000000e+00> : vector<4xf32>
    %688 = vector.multi_reduction <add>, %687, %cst_185 [0] : vector<4x4xf32> to vector<4xf32>
    %689 = vector.shape_cast %688 : vector<4xf32> to vector<1x4xf32>
    %cst_186 = arith.constant 2.500000e-01 : f32
    %690 = vector.broadcast %cst_186 : f32 to vector<1x4xf32>
    %691 = arith.subf %689, %690 : vector<1x4xf32>
    %692 = math.absf %691 : vector<1x4xf32>
    %693 = vector.shape_cast %692 : vector<1x4xf32> to vector<1x1x4xf32>
    %cst_187 = arith.constant dense<0xFF800000> : vector<1xf32>
    %694 = vector.multi_reduction <maximumf>, %693, %cst_187 [1, 2] : vector<1x1x4xf32> to vector<1xf32>
    %695 = vector.shape_cast %694 : vector<1xf32> to vector<1x1x1xf32>
    %696 = vector.extract %695[0, 0, 0] : f32 from vector<1x1x1xf32>
    %cst_188 = arith.constant 9.99999997E-7 : f32
    %697 = arith.cmpf ole, %696, %cst_188 : f32
    %698 = arith.extui %697 : i1 to i32
    %699 = arith.sitofp %698 : i32 to f32
    %700 = tpu.reciprocal %689 {approx = true} : vector<1x4xf32> -> vector<1x4xf32>
    %cst_189 = arith.constant 2.500000e-01 : f32
    %701 = vector.broadcast %cst_189 : f32 to vector<1x4xf32>
    %702 = arith.mulf %700, %701 : vector<1x4xf32>
    %703 = vector.broadcast %702 : vector<1x4xf32> to vector<4x4xf32>
    %704 = arith.mulf %687, %703 : vector<4x4xf32>
    %705 = vector.broadcast %699 : f32 to vector<4x4xf32>
    %706 = arith.mulf %705, %687 : vector<4x4xf32>
    %cst_190 = arith.constant 1.000000e+00 : f32
    %707 = arith.subf %cst_190, %699 : f32
    %708 = vector.broadcast %707 : f32 to vector<4x4xf32>
    %709 = arith.mulf %708, %704 : vector<4x4xf32>
    %710 = arith.addf %706, %709 : vector<4x4xf32>
    %711 = vector.broadcast %680 : f32 to vector<4x4xf32>
    %712 = arith.mulf %711, %710 : vector<4x4xf32>
    %cst_191 = arith.constant 1.000000e+00 : f32
    %713 = arith.subf %cst_191, %680 : f32
    %714 = vector.broadcast %713 : f32 to vector<4x4xf32>
    %715 = arith.mulf %714, %678 : vector<4x4xf32>
    %716 = arith.addf %712, %715 : vector<4x4xf32>
    %cst_192 = arith.constant 1.000000e+00 : f32
    %717 = arith.subf %cst_192, %699 : f32
    %718 = arith.mulf %680, %717 : f32
    %c18_i32 = arith.constant 18 : i32
    %cst_193 = arith.constant dense<0.000000e+00> : vector<4xf32>
    %719 = vector.multi_reduction <add>, %716, %cst_193 [1] : vector<4x4xf32> to vector<4xf32>
    %720 = vector.shape_cast %719 : vector<4xf32> to vector<4x1xf32>
    %721 = tpu.reciprocal %720 {approx = true} : vector<4x1xf32> -> vector<4x1xf32>
    %cst_194 = arith.constant 2.500000e-01 : f32
    %722 = vector.broadcast %cst_194 : f32 to vector<4x1xf32>
    %723 = arith.mulf %721, %722 : vector<4x1xf32>
    %724 = vector.broadcast %723 : vector<4x1xf32> to vector<4x4xf32>
    %725 = arith.mulf %716, %724 : vector<4x4xf32>
    %cst_195 = arith.constant dense<0.000000e+00> : vector<4xf32>
    %726 = vector.multi_reduction <add>, %725, %cst_195 [0] : vector<4x4xf32> to vector<4xf32>
    %727 = vector.shape_cast %726 : vector<4xf32> to vector<1x4xf32>
    %cst_196 = arith.constant 2.500000e-01 : f32
    %728 = vector.broadcast %cst_196 : f32 to vector<1x4xf32>
    %729 = arith.subf %727, %728 : vector<1x4xf32>
    %730 = math.absf %729 : vector<1x4xf32>
    %731 = vector.shape_cast %730 : vector<1x4xf32> to vector<1x1x4xf32>
    %cst_197 = arith.constant dense<0xFF800000> : vector<1xf32>
    %732 = vector.multi_reduction <maximumf>, %731, %cst_197 [1, 2] : vector<1x1x4xf32> to vector<1xf32>
    %733 = vector.shape_cast %732 : vector<1xf32> to vector<1x1x1xf32>
    %734 = vector.extract %733[0, 0, 0] : f32 from vector<1x1x1xf32>
    %cst_198 = arith.constant 9.99999997E-7 : f32
    %735 = arith.cmpf ole, %734, %cst_198 : f32
    %736 = arith.extui %735 : i1 to i32
    %737 = arith.sitofp %736 : i32 to f32
    %738 = tpu.reciprocal %727 {approx = true} : vector<1x4xf32> -> vector<1x4xf32>
    %cst_199 = arith.constant 2.500000e-01 : f32
    %739 = vector.broadcast %cst_199 : f32 to vector<1x4xf32>
    %740 = arith.mulf %738, %739 : vector<1x4xf32>
    %741 = vector.broadcast %740 : vector<1x4xf32> to vector<4x4xf32>
    %742 = arith.mulf %725, %741 : vector<4x4xf32>
    %743 = vector.broadcast %737 : f32 to vector<4x4xf32>
    %744 = arith.mulf %743, %725 : vector<4x4xf32>
    %cst_200 = arith.constant 1.000000e+00 : f32
    %745 = arith.subf %cst_200, %737 : f32
    %746 = vector.broadcast %745 : f32 to vector<4x4xf32>
    %747 = arith.mulf %746, %742 : vector<4x4xf32>
    %748 = arith.addf %744, %747 : vector<4x4xf32>
    %749 = vector.broadcast %718 : f32 to vector<4x4xf32>
    %750 = arith.mulf %749, %748 : vector<4x4xf32>
    %cst_201 = arith.constant 1.000000e+00 : f32
    %751 = arith.subf %cst_201, %718 : f32
    %752 = vector.broadcast %751 : f32 to vector<4x4xf32>
    %753 = arith.mulf %752, %716 : vector<4x4xf32>
    %754 = arith.addf %750, %753 : vector<4x4xf32>
    %cst_202 = arith.constant 1.000000e+00 : f32
    %755 = arith.subf %cst_202, %737 : f32
    %756 = arith.mulf %718, %755 : f32
    %c19_i32 = arith.constant 19 : i32
    %cst_203 = arith.constant dense<0.000000e+00> : vector<4xf32>
    %757 = vector.multi_reduction <add>, %754, %cst_203 [1] : vector<4x4xf32> to vector<4xf32>
    %758 = vector.shape_cast %757 : vector<4xf32> to vector<4x1xf32>
    %759 = tpu.reciprocal %758 {approx = true} : vector<4x1xf32> -> vector<4x1xf32>
    %cst_204 = arith.constant 2.500000e-01 : f32
    %760 = vector.broadcast %cst_204 : f32 to vector<4x1xf32>
    %761 = arith.mulf %759, %760 : vector<4x1xf32>
    %762 = vector.broadcast %761 : vector<4x1xf32> to vector<4x4xf32>
    %763 = arith.mulf %754, %762 : vector<4x4xf32>
    %cst_205 = arith.constant dense<0.000000e+00> : vector<4xf32>
    %764 = vector.multi_reduction <add>, %763, %cst_205 [0] : vector<4x4xf32> to vector<4xf32>
    %765 = vector.shape_cast %764 : vector<4xf32> to vector<1x4xf32>
    %cst_206 = arith.constant 2.500000e-01 : f32
    %766 = vector.broadcast %cst_206 : f32 to vector<1x4xf32>
    %767 = arith.subf %765, %766 : vector<1x4xf32>
    %768 = math.absf %767 : vector<1x4xf32>
    %769 = vector.shape_cast %768 : vector<1x4xf32> to vector<1x1x4xf32>
    %cst_207 = arith.constant dense<0xFF800000> : vector<1xf32>
    %770 = vector.multi_reduction <maximumf>, %769, %cst_207 [1, 2] : vector<1x1x4xf32> to vector<1xf32>
    %771 = vector.shape_cast %770 : vector<1xf32> to vector<1x1x1xf32>
    %772 = vector.extract %771[0, 0, 0] : f32 from vector<1x1x1xf32>
    %cst_208 = arith.constant 9.99999997E-7 : f32
    %773 = arith.cmpf ole, %772, %cst_208 : f32
    %774 = arith.extui %773 : i1 to i32
    %775 = arith.sitofp %774 : i32 to f32
    %776 = tpu.reciprocal %765 {approx = true} : vector<1x4xf32> -> vector<1x4xf32>
    %cst_209 = arith.constant 2.500000e-01 : f32
    %777 = vector.broadcast %cst_209 : f32 to vector<1x4xf32>
    %778 = arith.mulf %776, %777 : vector<1x4xf32>
    %779 = vector.broadcast %778 : vector<1x4xf32> to vector<4x4xf32>
    %780 = arith.mulf %763, %779 : vector<4x4xf32>
    %781 = vector.broadcast %775 : f32 to vector<4x4xf32>
    %782 = arith.mulf %781, %763 : vector<4x4xf32>
    %cst_210 = arith.constant 1.000000e+00 : f32
    %783 = arith.subf %cst_210, %775 : f32
    %784 = vector.broadcast %783 : f32 to vector<4x4xf32>
    %785 = arith.mulf %784, %780 : vector<4x4xf32>
    %786 = arith.addf %782, %785 : vector<4x4xf32>
    %787 = vector.broadcast %756 : f32 to vector<4x4xf32>
    %788 = arith.mulf %787, %786 : vector<4x4xf32>
    %cst_211 = arith.constant 1.000000e+00 : f32
    %789 = arith.subf %cst_211, %756 : f32
    %790 = vector.broadcast %789 : f32 to vector<4x4xf32>
    %791 = arith.mulf %790, %754 : vector<4x4xf32>
    %792 = arith.addf %788, %791 : vector<4x4xf32>
    %cst_212 = arith.constant 1.000000e+00 : f32
    %793 = arith.subf %cst_212, %775 : f32
    %794 = arith.mulf %756, %793 : f32
    %795 = arith.mulf %792, %29 : vector<4x4xf32>
    %796 = vector.shape_cast %795 : vector<4x4xf32> to vector<1x4x4xf32>
    %cst_213 = arith.constant dense<0.000000e+00> : vector<1xf32>
    %797 = vector.multi_reduction <add>, %796, %cst_213 [1, 2] : vector<1x4x4xf32> to vector<1xf32>
    %798 = vector.shape_cast %797 : vector<1xf32> to vector<1x1x1xf32>
    %799 = vector.extract %798[0, 0, 0] : f32 from vector<1x1x1xf32>
    %c0_214 = arith.constant 0 : index
    %c0_215 = arith.constant 0 : index
    %800 = memref.load %arg3[%c0_214, %c0_215] : memref<1x1xf32, #tpu.memory_space<smem>>
    memref.store %799, %arg3[%c0_214, %c0_215] : memref<1x1xf32, #tpu.memory_space<smem>>
    %c0_216 = arith.constant 0 : index
    %c0_217 = arith.constant 0 : index
    %801 = vector.load %arg4[%c0_216, %c0_217] : memref<4x4xf32, #tpu.memory_space<vmem>>, vector<4x4xf32>
    tpu.vector_store %arg4[%c0_216, %c0_217], %792 {strides = array<i32>} : memref<4x4xf32, #tpu.memory_space<vmem>>, vector<4x4xf32>,
    %c0_218 = arith.constant 0 : index
    %c0_219 = arith.constant 0 : index
    %802 = vector.load %arg5[%c0_218, %c0_219] : memref<4x4xf32, #tpu.memory_space<vmem>>, vector<4x4xf32>
    tpu.vector_store %arg5[%c0_218, %c0_219], %29 {strides = array<i32>} : memref<4x4xf32, #tpu.memory_space<vmem>>, vector<4x4xf32>,
    return
  }
}

</mosaic_0001>

<llo_original>
// kernel: mixgnn_loss_forward.1
$region0: #{mixgnn_loss_forward.1}
  #allocation0 [shape = 'u32[]', space=smem, size = 0x4, offset = 0x4, fixed_abs, tag = 'smem constant byte address 0x4 - core index']
  #allocation1 [shape = 'u32[144,128]{1,0:T(1,128)}', space=vmem, size = 0x12000, scoped, tag = 'internal scratch']
  %s0 = inlined_call_operand.vmem [shape: f32[4,768], index: 0, kind: input, shape index: {}]
  %s1 = inlined_call_operand.vmem [shape: f32[768,64], index: 1, kind: input, shape index: {}]
  %s2 = inlined_call_operand.vmem [shape: f32[1,64], index: 2, kind: input, shape index: {}]
  %s3 = inlined_call_operand.hbm [shape: f32[1,1], index: 3, kind: output, shape index: {0}]
  %s4 = inlined_call_operand.hbm [shape: f32[4,4], index: 4, kind: output, shape index: {1}]
  %s5 = inlined_call_operand.hbm [shape: f32[4,4], index: 5, kind: output, shape index: {2}]
  %6 = xla_tuple %s3, %s4, %s5
  %s7 = sld [smem:[#allocation0]]
  $region38: #{mixgnn_loss_forward.1} parent=0
    _
  %s9 = ssub.s32 1, %s7
  %s10 = scalar_select 0, %s9, %s7
  $region1: #{mixgnn_loss_forward.1} parent=0
    #allocation2 [shape = 'u8[512]{0}', space=smem, size = 0x200, scoped, tag = 'output window, operand 0, single buffered']
    #allocation3 [shape = 's32[1]{0}', space=sflag, size = 0x4, scoped, tag = 'scoped memory for mixgnn_loss_forward.1']
    #allocation4 [shape = 's32[1]{0}', space=sflag, size = 0x4, scoped, tag = 'scoped memory for mixgnn_loss_forward.1']
    #allocation5 [shape = 'u8[2048]{0}', space=vmem, size = 0x800, scoped, tag = 'output window, operand 1, single buffered']
    #allocation6 [shape = 'u8[2048]{0}', space=vmem, size = 0x800, scoped, tag = 'output window, operand 2, single buffered']
    #allocation7 [shape = 's32[1]{0}', space=sflag, size = 0x4, scoped, tag = 'scoped memory for mixgnn_loss_forward.1']
    %11 = vsyncpa [#allocation4], 0
    %12 = vsyncpa [#allocation3], 0
    %13 = vsyncpa [#allocation7], 0
    // Predicated region
    $region2: #{mixgnn_loss_forward.1} parent=1 // pred_check
      _
    $region3: #{mixgnn_loss_forward.1} parent=1 // pred_check_branch
      %15 = sbr.rel (0) target = $region5
    $region4: #{mixgnn_loss_forward.1} parent=1 // pred_region
      _
    $region5: #{mixgnn_loss_forward.1} parent=1 // pred_fallthru
      _
    // Predicated region
    $region6: #{mixgnn_loss_forward.1} parent=1 // pred_check
      _
    $region7: #{mixgnn_loss_forward.1} parent=1 // pred_check_branch
      %17 = sbr.rel (0) target = $region9
    $region8: #{mixgnn_loss_forward.1} parent=1 // pred_region
      _
    $region9: #{mixgnn_loss_forward.1} parent=1 // pred_fallthru
      _
    // Predicated region
    $region10: #{mixgnn_loss_forward.1} parent=1 // pred_check
      _
    $region11: #{mixgnn_loss_forward.1} parent=1 // pred_check_branch
      %19 = sbr.rel (0) target = $region13
    $region12: #{mixgnn_loss_forward.1} parent=1 // pred_region
      _
    $region13: #{mixgnn_loss_forward.1} parent=1 // pred_fallthru
      _
    %v20 = vld [vmem:[%s0] sm:$0xff]
    %v21 = vld [vmem:[%s0 + $0x8] sm:$0xff]
    %v22 = vld [vmem:[%s0 + $0x10] sm:$0xff]
    %v23 = vld [vmem:[%s1] sm:$0xff]
    %v24 = vld [vmem:[%s1 + $0x8] sm:$0xff]
    %v25 = vld [vmem:[%s1 + $0x10] sm:$0xff]
    %v26 = vld [vmem:[%s1 + $0x18] sm:$0xff]
    %v27 = vld [vmem:[%s1 + $0x20] sm:$0xff]
    %v28 = vld [vmem:[%s1 + $0x28] sm:$0xff]
    %v29 = vld [vmem:[%s1 + $0x30] sm:$0xff]
    %v30 = vld [vmem:[%s1 + $0x38] sm:$0xff]
    %v31 = vld [vmem:[%s1 + $0x40] sm:$0xff]
    %v32 = vld [vmem:[%s1 + $0x48] sm:$0xff]
    %v33 = vld [vmem:[%s1 + $0x50] sm:$0xff]
    %v34 = vld [vmem:[%s1 + $0x58] sm:$0xff]
    %v35 = vld [vmem:[%s1 + $0x60] sm:$0xff]
    %v36 = vld [vmem:[%s1 + $0x68] sm:$0xff]
    %v37 = vld [vmem:[%s1 + $0x70] sm:$0xff]
    %v38 = vld [vmem:[%s1 + $0x78] sm:$0xff]
    %v39 = vld [vmem:[%s1 + $0x80] sm:$0xff]
    %v40 = vld [vmem:[%s1 + $0x88] sm:$0xff]
    %v41 = vld [vmem:[%s1 + $0x90] sm:$0xff]
    %v42 = vld [vmem:[%s1 + $0x98] sm:$0xff]
    %v43 = vld [vmem:[%s1 + $0xa0] sm:$0xff]
    %v44 = vld [vmem:[%s1 + $0xa8] sm:$0xff]
    %v45 = vld [vmem:[%s1 + $0xb0] sm:$0xff]
    %v46 = vld [vmem:[%s1 + $0xb8] sm:$0xff]
    %v47 = vld [vmem:[%s1 + $0xc0] sm:$0xff]
    %v48 = vld [vmem:[%s1 + $0xc8] sm:$0xff]
    %v49 = vld [vmem:[%s1 + $0xd0] sm:$0xff]
    %v50 = vld [vmem:[%s1 + $0xd8] sm:$0xff]
    %v51 = vld [vmem:[%s1 + $0xe0] sm:$0xff]
    %v52 = vld [vmem:[%s1 + $0xe8] sm:$0xff]
    %v53 = vld [vmem:[%s1 + $0xf0] sm:$0xff]
    %v54 = vld [vmem:[%s1 + $0xf8] sm:$0xff]
    %v55 = vld [vmem:[%s1 + $0x100] sm:$0xff]
    %v56 = vld [vmem:[%s1 + $0x108] sm:$0xff]
    %v57 = vld [vmem:[%s1 + $0x110] sm:$0xff]
    %v58 = vld [vmem:[%s1 + $0x118] sm:$0xff]
    %v59 = vld [vmem:[%s1 + $0x120] sm:$0xff]
    %v60 = vld [vmem:[%s1 + $0x128] sm:$0xff]
    %v61 = vld [vmem:[%s1 + $0x130] sm:$0xff]
    %v62 = vld [vmem:[%s1 + $0x138] sm:$0xff]
    %v63 = vld [vmem:[%s1 + $0x140] sm:$0xff]
    %v64 = vld [vmem:[%s1 + $0x148] sm:$0xff]
    %v65 = vld [vmem:[%s1 + $0x150] sm:$0xff]
    %v66 = vld [vmem:[%s1 + $0x158] sm:$0xff]
    %v67 = vld [vmem:[%s1 + $0x160] sm:$0xff]
    %v68 = vld [vmem:[%s1 + $0x168] sm:$0xff]
    %v69 = vld [vmem:[%s1 + $0x170] sm:$0xff]
    %v70 = vld [vmem:[%s1 + $0x178] sm:$0xff]
    %v71 = vld [vmem:[%s1 + $0x180] sm:$0xff]
    %v72 = vld [vmem:[%s1 + $0x188] sm:$0xff]
    %v73 = vld [vmem:[%s1 + $0x190] sm:$0xff]
    %v74 = vld [vmem:[%s1 + $0x198] sm:$0xff]
    %v75 = vld [vmem:[%s1 + $0x1a0] sm:$0xff]
    %v76 = vld [vmem:[%s1 + $0x1a8] sm:$0xff]
    %v77 = vld [vmem:[%s1 + $0x1b0] sm:$0xff]
    %v78 = vld [vmem:[%s1 + $0x1b8] sm:$0xff]
    %v79 = vld [vmem:[%s1 + $0x1c0] sm:$0xff]
    %v80 = vld [vmem:[%s1 + $0x1c8] sm:$0xff]
    %v81 = vld [vmem:[%s1 + $0x1d0] sm:$0xff]
    %v82 = vld [vmem:[%s1 + $0x1d8] sm:$0xff]
    %v83 = vld [vmem:[%s1 + $0x1e0] sm:$0xff]
    %v84 = vld [vmem:[%s1 + $0x1e8] sm:$0xff]
    %v85 = vld [vmem:[%s1 + $0x1f0] sm:$0xff]
    %v86 = vld [vmem:[%s1 + $0x1f8] sm:$0xff]
    %v87 = vld [vmem:[%s1 + $0x200] sm:$0xff]
    %v88 = vld [vmem:[%s1 + $0x208] sm:$0xff]
    %v89 = vld [vmem:[%s1 + $0x210] sm:$0xff]
    %v90 = vld [vmem:[%s1 + $0x218] sm:$0xff]
    %v91 = vld [vmem:[%s1 + $0x220] sm:$0xff]
    %v92 = vld [vmem:[%s1 + $0x228] sm:$0xff]
    %v93 = vld [vmem:[%s1 + $0x230] sm:$0xff]
    %v94 = vld [vmem:[%s1 + $0x238] sm:$0xff]
    %v95 = vld [vmem:[%s1 + $0x240] sm:$0xff]
    %v96 = vld [vmem:[%s1 + $0x248] sm:$0xff]
    %v97 = vld [vmem:[%s1 + $0x250] sm:$0xff]
    %v98 = vld [vmem:[%s1 + $0x258] sm:$0xff]
    %v99 = vld [vmem:[%s1 + $0x260] sm:$0xff]
    %v100 = vld [vmem:[%s1 + $0x268] sm:$0xff]
    %v101 = vld [vmem:[%s1 + $0x270] sm:$0xff]
    %v102 = vld [vmem:[%s1 + $0x278] sm:$0xff]
    %v103 = vld [vmem:[%s1 + $0x280] sm:$0xff]
    %v104 = vld [vmem:[%s1 + $0x288] sm:$0xff]
    %v105 = vld [vmem:[%s1 + $0x290] sm:$0xff]
    %v106 = vld [vmem:[%s1 + $0x298] sm:$0xff]
    %v107 = vld [vmem:[%s1 + $0x2a0] sm:$0xff]
    %v108 = vld [vmem:[%s1 + $0x2a8] sm:$0xff]
    %v109 = vld [vmem:[%s1 + $0x2b0] sm:$0xff]
    %v110 = vld [vmem:[%s1 + $0x2b8] sm:$0xff]
    %v111 = vld [vmem:[%s1 + $0x2c0] sm:$0xff]
    %v112 = vld [vmem:[%s1 + $0x2c8] sm:$0xff]
    %v113 = vld [vmem:[%s1 + $0x2d0] sm:$0xff]
    %v114 = vld [vmem:[%s1 + $0x2d8] sm:$0xff]
    %v115 = vld [vmem:[%s1 + $0x2e0] sm:$0xff]
    %v116 = vld [vmem:[%s1 + $0x2e8] sm:$0xff]
    %v117 = vld [vmem:[%s1 + $0x2f0] sm:$0xff]
    %v118 = vld [vmem:[%s1 + $0x2f8] sm:$0xff]
    %v119 = vld [vmem:[%s2] sm:$0x1]
    %v121 = vlaneseq
    %v122 = vshrl.u32 %v121, 7
    %v123 = vsub.s32 0, %v122
    %v124 = vrot.slane %v119, %v123
    %v129 = vcombine.high %v20, %v20
    %v130 = vcombine.high %v21, %v21
    %v131 = vcombine.high %v22, %v22
    %135 = vmatprep.subr.mxu0 0.0
    %136 = vmatpush1.msra.mxu0 %v23
    %137 = vmatprep.subr.mxu0 0.0
    %138 = vmatpush1.msra.mxu0 %v24
    %139 = vmatprep.subr.mxu0 0.0
    %140 = vmatpush1.msra.mxu0 %v25
    %141 = vmatprep.subr.mxu0 0.0
    %142 = vmatpush1.msra.mxu0 %v26
    %143 = vmatprep.subr.mxu0 0.0
    %144 = vmatpush1.msra.mxu0 %v27
    %145 = vmatprep.subr.mxu0 0.0
    %146 = vmatpush1.msra.mxu0 %v28
    %147 = vmatprep.subr.mxu0 0.0
    %148 = vmatpush1.msra.mxu0 %v29
    %149 = vmatprep.subr.mxu0 0.0
    %150 = vmatpush1.msra.mxu0 %v30
    %151 = vmatprep.subr.mxu0 0.0
    %152 = vmatpush1.msra.mxu0 %v31
    %153 = vmatprep.subr.mxu0 0.0
    %154 = vmatpush1.msra.mxu0 %v32
    %155 = vmatprep.subr.mxu0 0.0
    %156 = vmatpush1.msra.mxu0 %v33
    %157 = vmatprep.subr.mxu0 0.0
    %158 = vmatpush1.msra.mxu0 %v34
    %159 = vmatprep.subr.mxu0 0.0
    %160 = vmatpush1.msra.mxu0 %v35
    %161 = vmatprep.subr.mxu0 0.0
    %162 = vmatpush1.msra.mxu0 %v36
    %163 = vmatprep.subr.mxu0 0.0
    %164 = vmatpush1.msra.mxu0 %v37
    %165 = vmatprep.subr.mxu0 0.0
    %166 = vmatpush1.msra.mxu0 %v38
    %167 = vmatprep.subr.mxu0 0.0
    %168 = vmatpush1.msra.mxu0 %v39
    %169 = vmatprep.subr.mxu0 0.0
    %170 = vmatpush1.msra.mxu0 %v40
    %171 = vmatprep.subr.mxu0 0.0
    %172 = vmatpush1.msra.mxu0 %v41
    %173 = vmatprep.subr.mxu0 0.0
    %174 = vmatpush1.msra.mxu0 %v42
    %175 = vmatprep.subr.mxu0 0.0
    %176 = vmatpush1.msra.mxu0 %v43
    %177 = vmatprep.subr.mxu0 0.0
    %178 = vmatpush1.msra.mxu0 %v44
    %179 = vmatprep.subr.mxu0 0.0
    %180 = vmatpush1.msra.mxu0 %v45
    %181 = vmatprep.subr.mxu0 0.0
    %182 = vmatpush1.msra.mxu0 %v46
    %183 = vmatprep.subr.mxu0 0.0
    %184 = vmatpush1.msra.mxu0 %v47
    %185 = vmatprep.subr.mxu0 0.0
    %186 = vmatpush1.msra.mxu0 %v48
    %187 = vmatprep.subr.mxu0 0.0
    %188 = vmatpush1.msra.mxu0 %v49
    %189 = vmatprep.subr.mxu0 0.0
    %190 = vmatpush1.msra.mxu0 %v50
    %191 = vmatprep.subr.mxu0 0.0
    %192 = vmatpush1.msra.mxu0 %v51
    %193 = vmatprep.subr.mxu0 0.0
    %194 = vmatpush1.msra.mxu0 %v52
    %195 = vmatprep.subr.mxu0 0.0
    %196 = vmatpush1.msra.mxu0 %v53
    %197 = vmatprep.subr.mxu0 0.0
    %198 = vmatpush1.msra.mxu0 %v54
    %199 = vmatprep.mubr.f32.mxu0 %v129
    %200 = vmatmul.mubr.f32.gmra.mrb[0].mxu0 %v20
    %v201 = vpop.f32.mrb[0].mxu0
    %v202 = vadd.f32 %v124, %v201
    %v203 = vpop.f32.mrb[0].mxu0
    %204 = vdwg.mxu0
    %205 = vmatprep.subr.mxu0 0.0
    %206 = vmatpush1.msra.mxu0 %v55
    %207 = vmatprep.subr.mxu0 0.0
    %208 = vmatpush1.msra.mxu0 %v56
    %209 = vmatprep.subr.mxu0 0.0
    %210 = vmatpush1.msra.mxu0 %v57
    %211 = vmatprep.subr.mxu0 0.0
    %212 = vmatpush1.msra.mxu0 %v58
    %213 = vmatprep.subr.mxu0 0.0
    %214 = vmatpush1.msra.mxu0 %v59
    %215 = vmatprep.subr.mxu0 0.0
    %216 = vmatpush1.msra.mxu0 %v60
    %217 = vmatprep.subr.mxu0 0.0
    %218 = vmatpush1.msra.mxu0 %v61
    %219 = vmatprep.subr.mxu0 0.0
    %220 = vmatpush1.msra.mxu0 %v62
    %221 = vmatprep.subr.mxu0 0.0
    %222 = vmatpush1.msra.mxu0 %v63
    %223 = vmatprep.subr.mxu0 0.0
    %224 = vmatpush1.msra.mxu0 %v64
    %225 = vmatprep.subr.mxu0 0.0
    %226 = vmatpush1.msra.mxu0 %v65
    %227 = vmatprep.subr.mxu0 0.0
    %228 = vmatpush1.msra.mxu0 %v66
    %229 = vmatprep.subr.mxu0 0.0
    %230 = vmatpush1.msra.mxu0 %v67
    %231 = vmatprep.subr.mxu0 0.0
    %232 = vmatpush1.msra.mxu0 %v68
    %233 = vmatprep.subr.mxu0 0.0
    %234 = vmatpush1.msra.mxu0 %v69
    %235 = vmatprep.subr.mxu0 0.0
    %236 = vmatpush1.msra.mxu0 %v70
    %237 = vmatprep.subr.mxu0 0.0
    %238 = vmatpush1.msra.mxu0 %v71
    %239 = vmatprep.subr.mxu0 0.0
    %240 = vmatpush1.msra.mxu0 %v72
    %241 = vmatprep.subr.mxu0 0.0
    %242 = vmatpush1.msra.mxu0 %v73
    %243 = vmatprep.subr.mxu0 0.0
    %244 = vmatpush1.msra.mxu0 %v74
    %245 = vmatprep.subr.mxu0 0.0
    %246 = vmatpush1.msra.mxu0 %v75
    %247 = vmatprep.subr.mxu0 0.0
    %248 = vmatpush1.msra.mxu0 %v76
    %249 = vmatprep.subr.mxu0 0.0
    %250 = vmatpush1.msra.mxu0 %v77
    %251 = vmatprep.subr.mxu0 0.0
    %252 = vmatpush1.msra.mxu0 %v78
    %253 = vmatprep.subr.mxu0 0.0
    %254 = vmatpush1.msra.mxu0 %v79
    %255 = vmatprep.subr.mxu0 0.0
    %256 = vmatpush1.msra.mxu0 %v80
    %257 = vmatprep.subr.mxu0 0.0
    %258 = vmatpush1.msra.mxu0 %v81
    %259 = vmatprep.subr.mxu0 0.0
    %260 = vmatpush1.msra.mxu0 %v82
    %261 = vmatprep.subr.mxu0 0.0
    %262 = vmatpush1.msra.mxu0 %v83
    %263 = vmatprep.subr.mxu0 0.0
    %264 = vmatpush1.msra.mxu0 %v84
    %265 = vmatprep.subr.mxu0 0.0
    %266 = vmatpush1.msra.mxu0 %v85
    %267 = vmatprep.subr.mxu0 0.0
    %268 = vmatpush1.msra.mxu0 %v86
    %269 = vmatprep.mubr.f32.mxu0 %v130
    %270 = vmatmul.mubr.f32.gmra.mrb[0].mxu0 %v21
    %v271 = vpop.f32.mrb[0].mxu0
    %v272 = vadd.f32 %v202, %v271
    %v273 = vpop.f32.mrb[0].mxu0
    %274 = vdwg.mxu0
    %275 = vmatprep.subr.mxu0 0.0
    %276 = vmatpush1.msra.mxu0 %v87
    %277 = vmatprep.subr.mxu0 0.0
    %278 = vmatpush1.msra.mxu0 %v88
    %279 = vmatprep.subr.mxu0 0.0
    %280 = vmatpush1.msra.mxu0 %v89
    %281 = vmatprep.subr.mxu0 0.0
    %282 = vmatpush1.msra.mxu0 %v90
    %283 = vmatprep.subr.mxu0 0.0
    %284 = vmatpush1.msra.mxu0 %v91
    %285 = vmatprep.subr.mxu0 0.0
    %286 = vmatpush1.msra.mxu0 %v92
    %287 = vmatprep.subr.mxu0 0.0
    %288 = vmatpush1.msra.mxu0 %v93
    %289 = vmatprep.subr.mxu0 0.0
    %290 = vmatpush1.msra.mxu0 %v94
    %291 = vmatprep.subr.mxu0 0.0
    %292 = vmatpush1.msra.mxu0 %v95
    %293 = vmatprep.subr.mxu0 0.0
    %294 = vmatpush1.msra.mxu0 %v96
    %295 = vmatprep.subr.mxu0 0.0
    %296 = vmatpush1.msra.mxu0 %v97
    %297 = vmatprep.subr.mxu0 0.0
    %298 = vmatpush1.msra.mxu0 %v98
    %299 = vmatprep.subr.mxu0 0.0
    %300 = vmatpush1.msra.mxu0 %v99
    %301 = vmatprep.subr.mxu0 0.0
    %302 = vmatpush1.msra.mxu0 %v100
    %303 = vmatprep.subr.mxu0 0.0
    %304 = vmatpush1.msra.mxu0 %v101
    %305 = vmatprep.subr.mxu0 0.0
    %306 = vmatpush1.msra.mxu0 %v102
    %307 = vmatprep.subr.mxu0 0.0
    %308 = vmatpush1.msra.mxu0 %v103
    %309 = vmatprep.subr.mxu0 0.0
    %310 = vmatpush1.msra.mxu0 %v104
    %311 = vmatprep.subr.mxu0 0.0
    %312 = vmatpush1.msra.mxu0 %v105
    %313 = vmatprep.subr.mxu0 0.0
    %314 = vmatpush1.msra.mxu0 %v106
    %315 = vmatprep.subr.mxu0 0.0
    %316 = vmatpush1.msra.mxu0 %v107
    %317 = vmatprep.subr.mxu0 0.0
    %318 = vmatpush1.msra.mxu0 %v108
    %319 = vmatprep.subr.mxu0 0.0
    %320 = vmatpush1.msra.mxu0 %v109
    %321 = vmatprep.subr.mxu0 0.0
    %322 = vmatpush1.msra.mxu0 %v110
    %323 = vmatprep.subr.mxu0 0.0
    %324 = vmatpush1.msra.mxu0 %v111
    %325 = vmatprep.subr.mxu0 0.0
    %326 = vmatpush1.msra.mxu0 %v112
    %327 = vmatprep.subr.mxu0 0.0
    %328 = vmatpush1.msra.mxu0 %v113
    %329 = vmatprep.subr.mxu0 0.0
    %330 = vmatpush1.msra.mxu0 %v114
    %331 = vmatprep.subr.mxu0 0.0
    %332 = vmatpush1.msra.mxu0 %v115
    %333 = vmatprep.subr.mxu0 0.0
    %334 = vmatpush1.msra.mxu0 %v116
    %335 = vmatprep.subr.mxu0 0.0
    %336 = vmatpush1.msra.mxu0 %v117
    %337 = vmatprep.subr.mxu0 0.0
    %338 = vmatpush1.msra.mxu0 %v118
    %339 = vmatprep.mubr.f32.mxu0 %v131
    %340 = vmatmul.mubr.f32.gmra.mrb[0].mxu0 %v22
    %v341 = vpop.f32.mrb[0].mxu0
    %v342 = vadd.f32 %v272, %v341
    %v343 = vpop.f32.mrb[0].mxu0
    %344 = vdwg.mxu0
    %v345 = vmul.f32 %v342, %v342
    %vm346 = vcmask 257024
    %v347 = vsel %vm346, %v345, 0.0
    %348 = vadd.xlane.f32.xlu0 %v347
    %v349 = vpop.xlane.xlu0 %348
    %v350 = vrsqrt.pop %v349
    %v351 = vmul.f32 %v342, %v350
    %353 = vrot.lane.b32.xlu0 %v345, 96
    %v354 = vpop.permute.xlu0 %353
    %v356 = vsel %vm346, %v354, 0.0
    %357 = vadd.xlane.f32.xlu0 %v356
    %v358 = vpop.xlane.xlu0 %357
    %v359 = vrsqrt.pop %v358
    %v360 = vmul.f32 %v342, %v359
    %362 = vrot.lane.b32.xlu0 %v360, 96
    %v363 = vpop.permute.xlu0 %362
    %vm364 = vcmask 261120
    %v365 = vsel %vm364, %v363, 0
    %v368 = vsel %vm364, %v351, 0
    %370 = vmatprep.subr.mxu0 0.0
    %371 = vmatpush1.xpose.msra.mxu0 %v368
    %372 = vmatprep.subr.mxu0 0.0
    %373 = vmatpush1.xpose.msra.mxu0 0.0
    %374 = vmatprep.subr.mxu0 0.0
    %375 = vmatpush1.xpose.msra.mxu0 0.0
    %376 = vmatprep.subr.mxu0 0.0
    %377 = vmatpush1.xpose.msra.mxu0 0.0
    %378 = vmatprep.subr.mxu0 0.0
    %379 = vmatpush1.xpose.msra.mxu0 0.0
    %380 = vmatprep.subr.mxu0 0.0
    %381 = vmatpush1.xpose.msra.mxu0 0.0
    %382 = vmatprep.subr.mxu0 0.0
    %383 = vmatpush1.xpose.msra.mxu0 0.0
    %384 = vmatprep.subr.mxu0 0.0
    %385 = vmatpush1.xpose.msra.mxu0 0.0
    %386 = vmatprep.subr.mxu0 0.0
    %387 = vmatpush1.xpose.msra.mxu0 0.0
    %388 = vmatprep.subr.mxu0 0.0
    %389 = vmatpush1.xpose.msra.mxu0 0.0
    %390 = vmatprep.subr.mxu0 0.0
    %391 = vmatpush1.xpose.msra.mxu0 0.0
    %392 = vmatprep.subr.mxu0 0.0
    %393 = vmatpush1.xpose.msra.mxu0 0.0
    %394 = vmatprep.subr.mxu0 0.0
    %395 = vmatpush1.xpose.msra.mxu0 0.0
    %396 = vmatprep.subr.mxu0 0.0
    %397 = vmatpush1.xpose.msra.mxu0 0.0
    %398 = vmatprep.subr.mxu0 0.0
    %399 = vmatpush1.xpose.msra.mxu0 0.0
    %400 = vmatprep.subr.mxu0 0.0
    %401 = vmatpush1.xpose.msra.mxu0 0.0
    %402 = vmatprep.subr.mxu0 0.0
    %403 = vmatpush1.xpose.msra.mxu0 0.0
    %404 = vmatprep.subr.mxu0 0.0
    %405 = vmatpush1.xpose.msra.mxu0 0.0
    %406 = vmatprep.subr.mxu0 0.0
    %407 = vmatpush1.xpose.msra.mxu0 0.0
    %408 = vmatprep.subr.mxu0 0.0
    %409 = vmatpush1.xpose.msra.mxu0 0.0
    %410 = vmatprep.subr.mxu0 0.0
    %411 = vmatpush1.xpose.msra.mxu0 0.0
    %412 = vmatprep.subr.mxu0 0.0
    %413 = vmatpush1.xpose.msra.mxu0 0.0
    %414 = vmatprep.subr.mxu0 0.0
    %415 = vmatpush1.xpose.msra.mxu0 0.0
    %416 = vmatprep.subr.mxu0 0.0
    %417 = vmatpush1.xpose.msra.mxu0 0.0
    %418 = vmatprep.subr.mxu0 0.0
    %419 = vmatpush1.xpose.msra.mxu0 0.0
    %420 = vmatprep.subr.mxu0 0.0
    %421 = vmatpush1.xpose.msra.mxu0 0.0
    %422 = vmatprep.subr.mxu0 0.0
    %423 = vmatpush1.xpose.msra.mxu0 0.0
    %424 = vmatprep.subr.mxu0 0.0
    %425 = vmatpush1.xpose.msra.mxu0 0.0
    %426 = vmatprep.subr.mxu0 0.0
    %427 = vmatpush1.xpose.msra.mxu0 0.0
    %428 = vmatprep.subr.mxu0 0.0
    %429 = vmatpush1.xpose.msra.mxu0 0.0
    %430 = vmatprep.subr.mxu0 0.0
    %431 = vmatpush1.xpose.msra.mxu0 0.0
    %432 = vmatprep.subr.mxu0 0.0
    %433 = vmatpush1.xpose.msra.mxu0 0.0
    %434 = vmatprep.mubr.f32.mxu0 0.0
    %435 = vmatmul.mubr.f32.gmra.mrb[0].mxu0 %v365
    %v436 = vpop.f32.mrb[0].mxu0
    %v437 = vadd.f32 0.0, %v436
    %v438 = vpop.f32.mrb[0].mxu0
    %439 = vdwg.mxu0
    %v440 = vmul.f32 %v437, %v437
    %vm441 = vcmask 27648
    %v442 = vsel %vm441, %v440, inf
    %443 = vmin.xlane.f32.xlu0 %v442
    %v444 = vpop.xlane.xlu0 %443
    %v445 = vsub.f32 %v440, %v444
    %v446 = vsel %vm441, %v445, -inf
    %447 = vmax.xlane.f32.xlu0 %v446
    %v448 = vpop.xlane.xlu0 %447
    %v449 = vrcp.pop %v448
    %v450 = vmul.f32 %v445, %v449
    %v451 = vsub.f32 1.0, %v450
    %v452 = vmul.f32 %v451, -1.0
    %v453 = vmul.f32 %v452, 1.442695
    %v454 = vpow.pop %v453
    %v455 = vsel %vm441, %v454, 0.0
    %456 = vadd.xlane.f32.xlu0 %v455
    %v457 = vpop.xlane.xlu0 %456
    %v458 = vrcp.pop %v457
    %v459 = vmul.f32 %v458, 0.25
    %v460 = vmul.f32 %v454, %v459
    %v461 = vsel %vm441, %v460, 0.0
    %v462 = vrot.slane %v461, 4
    %v463 = vadd.f32 %v461, %v462
    %v464 = vrot.slane %v463, 2
    %v465 = vadd.f32 %v463, %v464
    %v466 = vrot.slane %v465, 1
    %v467 = vadd.f32 %v465, %v466
    %v468 = vsub.f32 %v467, 0.25
    %v469 = vand.u32 2147483647, %v468
    %vm470 = vcmask 31744
    %v471 = vsel %vm470, %v469, -inf
    %472 = vmax.xlane.f32.xlu0 %v471
    %v473 = vpop.xlane.xlu0 %472
    %s474 = vtos %v473
    %p475 = scmp.le.f32.partialorder %s474, 1e-06
    %s476 = scalar_select %p475, 1, 0
    %s477 = scvt.s32.f32 %s476
    %v478 = vrcp.pop %v467
    %v479 = vmul.f32 %v478, 0.25
    %v480 = vmul.f32 %v460, %v479
    %v481 = vstv %s477
    %v482 = vmul.f32 %v481, %v460
    %s483 = ssub.f32 1.0, %s477
    %v484 = vstv %s483
    %v485 = vmul.f32 %v484, %v480
    %v486 = vadd.f32 %v482, %v485
    %v487 = vmul.f32 %v454, 0.0
    %v488 = vadd.f32 %v486, %v487
    %v489 = vsel %vm441, %v488, 0.0
    %490 = vadd.xlane.f32.xlu0 %v489
    %v491 = vpop.xlane.xlu0 %490
    %v492 = vrcp.pop %v491
    %v493 = vmul.f32 %v492, 0.25
    %v494 = vmul.f32 %v488, %v493
    %v495 = vsel %vm441, %v494, 0.0
    %v496 = vrot.slane %v495, 4
    %v497 = vadd.f32 %v495, %v496
    %v498 = vrot.slane %v497, 2
    %v499 = vadd.f32 %v497, %v498
    %v500 = vrot.slane %v499, 1
    %v501 = vadd.f32 %v499, %v500
    %v502 = vsub.f32 %v501, 0.25
    %v503 = vand.u32 2147483647, %v502
    %v504 = vsel %vm470, %v503, -inf
    %505 = vmax.xlane.f32.xlu0 %v504
    %v506 = vpop.xlane.xlu0 %505
    %s507 = vtos %v506
    %p508 = scmp.le.f32.partialorder %s507, 1e-06
    %s509 = scalar_select %p508, 1, 0
    %s510 = scvt.s32.f32 %s509
    %v511 = vrcp.pop %v501
    %v512 = vmul.f32 %v511, 0.25
    %v513 = vmul.f32 %v494, %v512
    %v514 = vstv %s510
    %v515 = vmul.f32 %v514, %v494
    %s516 = ssub.f32 1.0, %s510
    %v517 = vstv %s516
    %v518 = vmul.f32 %v517, %v513
    %v519 = vadd.f32 %v515, %v518
    %v520 = vmul.f32 %v484, %v519
    %s521 = ssub.f32 1.0, %s483
    %v522 = vstv %s521
    %v523 = vmul.f32 %v522, %v488
    %v524 = vadd.f32 %v520, %v523
    %s525 = smul.f32 %s483, %s516
    %v526 = vsel %vm441, %v524, 0.0
    %527 = vadd.xlane.f32.xlu0 %v526
    %v528 = vpop.xlane.xlu0 %527
    %v529 = vrcp.pop %v528
    %v530 = vmul.f32 %v529, 0.25
    %v531 = vmul.f32 %v524, %v530
    %v532 = vsel %vm441, %v531, 0.0
    %v533 = vrot.slane %v532, 4
    %v534 = vadd.f32 %v532, %v533
    %v535 = vrot.slane %v534, 2
    %v536 = vadd.f32 %v534, %v535
    %v537 = vrot.slane %v536, 1
    %v538 = vadd.f32 %v536, %v537
    %v539 = vsub.f32 %v538, 0.25
    %v540 = vand.u32 2147483647, %v539
    %v541 = vsel %vm470, %v540, -inf
    %542 = vmax.xlane.f32.xlu0 %v541
    %v543 = vpop.xlane.xlu0 %542
    %s544 = vtos %v543
    %p545 = scmp.le.f32.partialorder %s544, 1e-06
    %s546 = scalar_select %p545, 1, 0
    %s547 = scvt.s32.f32 %s546
    %v548 = vrcp.pop %v538
    %v549 = vmul.f32 %v548, 0.25
    %v550 = vmul.f32 %v531, %v549
    %v551 = vstv %s547
    %v552 = vmul.f32 %v551, %v531
    %s553 = ssub.f32 1.0, %s547
    %v554 = vstv %s553
    %v555 = vmul.f32 %v554, %v550
    %v556 = vadd.f32 %v552, %v555
    %v557 = vstv %s525
    %v558 = vmul.f32 %v557, %v556
    %s559 = ssub.f32 1.0, %s525
    %v560 = vstv %s559
    %v561 = vmul.f32 %v560, %v524
    %v562 = vadd.f32 %v558, %v561
    %s563 = smul.f32 %s525, %s553
    %v564 = vsel %vm441, %v562, 0.0
    %565 = vadd.xlane.f32.xlu0 %v564
    %v566 = vpop.xlane.xlu0 %565
    %v567 = vrcp.pop %v566
    %v568 = vmul.f32 %v567, 0.25
    %v569 = vmul.f32 %v562, %v568
    %v570 = vsel %vm441, %v569, 0.0
    %v571 = vrot.slane %v570, 4
    %v572 = vadd.f32 %v570, %v571
    %v573 = vrot.slane %v572, 2
    %v574 = vadd.f32 %v572, %v573
    %v575 = vrot.slane %v574, 1
    %v576 = vadd.f32 %v574, %v575
    %v577 = vsub.f32 %v576, 0.25
    %v578 = vand.u32 2147483647, %v577
    %v579 = vsel %vm470, %v578, -inf
    %580 = vmax.xlane.f32.xlu0 %v579
    %v581 = vpop.xlane.xlu0 %580
    %s582 = vtos %v581
    %p583 = scmp.le.f32.partialorder %s582, 1e-06
    %s584 = scalar_select %p583, 1, 0
    %s585 = scvt.s32.f32 %s584
    %v586 = vrcp.pop %v576
    %v587 = vmul.f32 %v586, 0.25
    %v588 = vmul.f32 %v569, %v587
    %v589 = vstv %s585
    %v590 = vmul.f32 %v589, %v569
    %s591 = ssub.f32 1.0, %s585
    %v592 = vstv %s591
    %v593 = vmul.f32 %v592, %v588
    %v594 = vadd.f32 %v590, %v593
    %v595 = vstv %s563
    %v596 = vmul.f32 %v595, %v594
    %s597 = ssub.f32 1.0, %s563
    %v598 = vstv %s597
    %v599 = vmul.f32 %v598, %v562
    %v600 = vadd.f32 %v596, %v599
    %s601 = smul.f32 %s563, %s591
    %v602 = vsel %vm441, %v600, 0.0
    %603 = vadd.xlane.f32.xlu0 %v602
    %v604 = vpop.xlane.xlu0 %603
    %v605 = vrcp.pop %v604
    %v606 = vmul.f32 %v605, 0.25
    %v607 = vmul.f32 %v600, %v606
    %v608 = vsel %vm441, %v607, 0.0
    %v609 = vrot.slane %v608, 4
    %v610 = vadd.f32 %v608, %v609
    %v611 = vrot.slane %v610, 2
    %v612 = vadd.f32 %v610, %v611
    %v613 = vrot.slane %v612, 1
    %v614 = vadd.f32 %v612, %v613
    %v615 = vsub.f32 %v614, 0.25
    %v616 = vand.u32 2147483647, %v615
    %v617 = vsel %vm470, %v616, -inf
    %618 = vmax.xlane.f32.xlu0 %v617
    %v619 = vpop.xlane.xlu0 %618
    %s620 = vtos %v619
    %p621 = scmp.le.f32.partialorder %s620, 1e-06
    %s622 = scalar_select %p621, 1, 0
    %s623 = scvt.s32.f32 %s622
    %v624 = vrcp.pop %v614
    %v625 = vmul.f32 %v624, 0.25
    %v626 = vmul.f32 %v607, %v625
    %v627 = vstv %s623
    %v628 = vmul.f32 %v627, %v607
    %s629 = ssub.f32 1.0, %s623
    %v630 = vstv %s629
    %v631 = vmul.f32 %v630, %v626
    %v632 = vadd.f32 %v628, %v631
    %v633 = vstv %s601
    %v634 = vmul.f32 %v633, %v632
    %s635 = ssub.f32 1.0, %s601
    %v636 = vstv %s635
    %v637 = vmul.f32 %v636, %v600
    %v638 = vadd.f32 %v634, %v637
    %s639 = smul.f32 %s601, %s629
    %v640 = vsel %vm441, %v638, 0.0
    %641 = vadd.xlane.f32.xlu0 %v640
    %v642 = vpop.xlane.xlu0 %641
    %v643 = vrcp.pop %v642
    %v644 = vmul.f32 %v643, 0.25
    %v645 = vmul.f32 %v638, %v644
    %v646 = vsel %vm441, %v645, 0.0
    %v647 = vrot.slane %v646, 4
    %v648 = vadd.f32 %v646, %v647
    %v649 = vrot.slane %v648, 2
    %v650 = vadd.f32 %v648, %v649
    %v651 = vrot.slane %v650, 1
    %v652 = vadd.f32 %v650, %v651
    %v653 = vsub.f32 %v652, 0.25
    %v654 = vand.u32 2147483647, %v653
    %v655 = vsel %vm470, %v654, -inf
    %656 = vmax.xlane.f32.xlu0 %v655
    %v657 = vpop.xlane.xlu0 %656
    %s658 = vtos %v657
    %p659 = scmp.le.f32.partialorder %s658, 1e-06
    %s660 = scalar_select %p659, 1, 0
    %s661 = scvt.s32.f32 %s660
    %v662 = vrcp.pop %v652
    %v663 = vmul.f32 %v662, 0.25
    %v664 = vmul.f32 %v645, %v663
    %v665 = vstv %s661
    %v666 = vmul.f32 %v665, %v645
    %s667 = ssub.f32 1.0, %s661
    %v668 = vstv %s667
    %v669 = vmul.f32 %v668, %v664
    %v670 = vadd.f32 %v666, %v669
    %v671 = vstv %s639
    %v672 = vmul.f32 %v671, %v670
    %s673 = ssub.f32 1.0, %s639
    %v674 = vstv %s673
    %v675 = vmul.f32 %v674, %v638
    %v676 = vadd.f32 %v672, %v675
    %s677 = smul.f32 %s639, %s667
    %v678 = vsel %vm441, %v676, 0.0
    %679 = vadd.xlane.f32.xlu0 %v678
    %v680 = vpop.xlane.xlu0 %679
    %v681 = vrcp.pop %v680
    %v682 = vmul.f32 %v681, 0.25
    %v683 = vmul.f32 %v676, %v682
    %v684 = vsel %vm441, %v683, 0.0
    %v685 = vrot.slane %v684, 4
    %v686 = vadd.f32 %v684, %v685
    %v687 = vrot.slane %v686, 2
    %v688 = vadd.f32 %v686, %v687
    %v689 = vrot.slane %v688, 1
    %v690 = vadd.f32 %v688, %v689
    %v691 = vsub.f32 %v690, 0.25
    %v692 = vand.u32 2147483647, %v691
    %v693 = vsel %vm470, %v692, -inf
    %694 = vmax.xlane.f32.xlu0 %v693
    %v695 = vpop.xlane.xlu0 %694
    %s696 = vtos %v695
    %p697 = scmp.le.f32.partialorder %s696, 1e-06
    %s698 = scalar_select %p697, 1, 0
    %s699 = scvt.s32.f32 %s698
    %v700 = vrcp.pop %v690
    %v701 = vmul.f32 %v700, 0.25
    %v702 = vmul.f32 %v683, %v701
    %v703 = vstv %s699
    %v704 = vmul.f32 %v703, %v683
    %s705 = ssub.f32 1.0, %s699
    %v706 = vstv %s705
    %v707 = vmul.f32 %v706, %v702
    %v708 = vadd.f32 %v704, %v707
    %v709 = vstv %s677
    %v710 = vmul.f32 %v709, %v708
    %s711 = ssub.f32 1.0, %s677
    %v712 = vstv %s711
    %v713 = vmul.f32 %v712, %v676
    %v714 = vadd.f32 %v710, %v713
    %s715 = smul.f32 %s677, %s705
    %v716 = vsel %vm441, %v714, 0.0
    %717 = vadd.xlane.f32.xlu0 %v716
    %v718 = vpop.xlane.xlu0 %717
    %v719 = vrcp.pop %v718
    %v720 = vmul.f32 %v719, 0.25
    %v721 = vmul.f32 %v714, %v720
    %v722 = vsel %vm441, %v721, 0.0
    %v723 = vrot.slane %v722, 4
    %v724 = vadd.f32 %v722, %v723
    %v725 = vrot.slane %v724, 2
    %v726 = vadd.f32 %v724, %v725
    %v727 = vrot.slane %v726, 1
    %v728 = vadd.f32 %v726, %v727
    %v729 = vsub.f32 %v728, 0.25
    %v730 = vand.u32 2147483647, %v729
    %v731 = vsel %vm470, %v730, -inf
    %732 = vmax.xlane.f32.xlu0 %v731
    %v733 = vpop.xlane.xlu0 %732
    %s734 = vtos %v733
    %p735 = scmp.le.f32.partialorder %s734, 1e-06
    %s736 = scalar_select %p735, 1, 0
    %s737 = scvt.s32.f32 %s736
    %v738 = vrcp.pop %v728
    %v739 = vmul.f32 %v738, 0.25
    %v740 = vmul.f32 %v721, %v739
    %v741 = vstv %s737
    %v742 = vmul.f32 %v741, %v721
    %s743 = ssub.f32 1.0, %s737
    %v744 = vstv %s743
    %v745 = vmul.f32 %v744, %v740
    %v746 = vadd.f32 %v742, %v745
    %v747 = vstv %s715
    %v748 = vmul.f32 %v747, %v746
    %s749 = ssub.f32 1.0, %s715
    %v750 = vstv %s749
    %v751 = vmul.f32 %v750, %v714
    %v752 = vadd.f32 %v748, %v751
    %s753 = smul.f32 %s715, %s743
    %v754 = vsel %vm441, %v752, 0.0
    %755 = vadd.xlane.f32.xlu0 %v754
    %v756 = vpop.xlane.xlu0 %755
    %v757 = vrcp.pop %v756
    %v758 = vmul.f32 %v757, 0.25
    %v759 = vmul.f32 %v752, %v758
    %v760 = vsel %vm441, %v759, 0.0
    %v761 = vrot.slane %v760, 4
    %v762 = vadd.f32 %v760, %v761
    %v763 = vrot.slane %v762, 2
    %v764 = vadd.f32 %v762, %v763
    %v765 = vrot.slane %v764, 1
    %v766 = vadd.f32 %v764, %v765
    %v767 = vsub.f32 %v766, 0.25
    %v768 = vand.u32 2147483647, %v767
    %v769 = vsel %vm470, %v768, -inf
    %770 = vmax.xlane.f32.xlu0 %v769
    %v771 = vpop.xlane.xlu0 %770
    %s772 = vtos %v771
    %p773 = scmp.le.f32.partialorder %s772, 1e-06
    %s774 = scalar_select %p773, 1, 0
    %s775 = scvt.s32.f32 %s774
    %v776 = vrcp.pop %v766
    %v777 = vmul.f32 %v776, 0.25
    %v778 = vmul.f32 %v759, %v777
    %v779 = vstv %s775
    %v780 = vmul.f32 %v779, %v759
    %s781 = ssub.f32 1.0, %s775
    %v782 = vstv %s781
    %v783 = vmul.f32 %v782, %v778
    %v784 = vadd.f32 %v780, %v783
    %v785 = vstv %s753
    %v786 = vmul.f32 %v785, %v784
    %s787 = ssub.f32 1.0, %s753
    %v788 = vstv %s787
    %v789 = vmul.f32 %v788, %v752
    %v790 = vadd.f32 %v786, %v789
    %s791 = smul.f32 %s753, %s781
    %v792 = vsel %vm441, %v790, 0.0
    %793 = vadd.xlane.f32.xlu0 %v792
    %v794 = vpop.xlane.xlu0 %793
    %v795 = vrcp.pop %v794
    %v796 = vmul.f32 %v795, 0.25
    %v797 = vmul.f32 %v790, %v796
    %v798 = vsel %vm441, %v797, 0.0
    %v799 = vrot.slane %v798, 4
    %v800 = vadd.f32 %v798, %v799
    %v801 = vrot.slane %v800, 2
    %v802 = vadd.f32 %v800, %v801
    %v803 = vrot.slane %v802, 1
    %v804 = vadd.f32 %v802, %v803
    %v805 = vsub.f32 %v804, 0.25
    %v806 = vand.u32 2147483647, %v805
    %v807 = vsel %vm470, %v806, -inf
    %808 = vmax.xlane.f32.xlu0 %v807
    %v809 = vpop.xlane.xlu0 %808
    %s810 = vtos %v809
    %p811 = scmp.le.f32.partialorder %s810, 1e-06
    %s812 = scalar_select %p811, 1, 0
    %s813 = scvt.s32.f32 %s812
    %v814 = vrcp.pop %v804
    %v815 = vmul.f32 %v814, 0.25
    %v816 = vmul.f32 %v797, %v815
    %v817 = vstv %s813
    %v818 = vmul.f32 %v817, %v797
    %s819 = ssub.f32 1.0, %s813
    %v820 = vstv %s819
    %v821 = vmul.f32 %v820, %v816
    %v822 = vadd.f32 %v818, %v821
    %v823 = vstv %s791
    %v824 = vmul.f32 %v823, %v822
    %s825 = ssub.f32 1.0, %s791
    %v826 = vstv %s825
    %v827 = vmul.f32 %v826, %v790
    %v828 = vadd.f32 %v824, %v827
    %s829 = smul.f32 %s791, %s819
    %v830 = vsel %vm441, %v828, 0.0
    %831 = vadd.xlane.f32.xlu0 %v830
    %v832 = vpop.xlane.xlu0 %831
    %v833 = vrcp.pop %v832
    %v834 = vmul.f32 %v833, 0.25
    %v835 = vmul.f32 %v828, %v834
    %v836 = vsel %vm441, %v835, 0.0
    %v837 = vrot.slane %v836, 4
    %v838 = vadd.f32 %v836, %v837
    %v839 = vrot.slane %v838, 2
    %v840 = vadd.f32 %v838, %v839
    %v841 = vrot.slane %v840, 1
    %v842 = vadd.f32 %v840, %v841
    %v843 = vsub.f32 %v842, 0.25
    %v844 = vand.u32 2147483647, %v843
    %v845 = vsel %vm470, %v844, -inf
    %846 = vmax.xlane.f32.xlu0 %v845
    %v847 = vpop.xlane.xlu0 %846
    %s848 = vtos %v847
    %p849 = scmp.le.f32.partialorder %s848, 1e-06
    %s850 = scalar_select %p849, 1, 0
    %s851 = scvt.s32.f32 %s850
    %v852 = vrcp.pop %v842
    %v853 = vmul.f32 %v852, 0.25
    %v854 = vmul.f32 %v835, %v853
    %v855 = vstv %s851
    %v856 = vmul.f32 %v855, %v835
    %s857 = ssub.f32 1.0, %s851
    %v858 = vstv %s857
    %v859 = vmul.f32 %v858, %v854
    %v860 = vadd.f32 %v856, %v859
    %v861 = vstv %s829
    %v862 = vmul.f32 %v861, %v860
    %s863 = ssub.f32 1.0, %s829
    %v864 = vstv %s863
    %v865 = vmul.f32 %v864, %v828
    %v866 = vadd.f32 %v862, %v865
    %s867 = smul.f32 %s829, %s857
    %v868 = vsel %vm441, %v866, 0.0
    %869 = vadd.xlane.f32.xlu0 %v868
    %v870 = vpop.xlane.xlu0 %869
    %v871 = vrcp.pop %v870
    %v872 = vmul.f32 %v871, 0.25
    %v873 = vmul.f32 %v866, %v872
    %v874 = vsel %vm441, %v873, 0.0
    %v875 = vrot.slane %v874, 4
    %v876 = vadd.f32 %v874, %v875
    %v877 = vrot.slane %v876, 2
    %v878 = vadd.f32 %v876, %v877
    %v879 = vrot.slane %v878, 1
    %v880 = vadd.f32 %v878, %v879
    %v881 = vsub.f32 %v880, 0.25
    %v882 = vand.u32 2147483647, %v881
    %v883 = vsel %vm470, %v882, -inf
    %884 = vmax.xlane.f32.xlu0 %v883
    %v885 = vpop.xlane.xlu0 %884
    %s886 = vtos %v885
    %p887 = scmp.le.f32.partialorder %s886, 1e-06
    %s888 = scalar_select %p887, 1, 0
    %s889 = scvt.s32.f32 %s888
    %v890 = vrcp.pop %v880
    %v891 = vmul.f32 %v890, 0.25
    %v892 = vmul.f32 %v873, %v891
    %v893 = vstv %s889
    %v894 = vmul.f32 %v893, %v873
    %s895 = ssub.f32 1.0, %s889
    %v896 = vstv %s895
    %v897 = vmul.f32 %v896, %v892
    %v898 = vadd.f32 %v894, %v897
    %v899 = vstv %s867
    %v900 = vmul.f32 %v899, %v898
    %s901 = ssub.f32 1.0, %s867
    %v902 = vstv %s901
    %v903 = vmul.f32 %v902, %v866
    %v904 = vadd.f32 %v900, %v903
    %s905 = smul.f32 %s867, %s895
    %v906 = vsel %vm441, %v904, 0.0
    %907 = vadd.xlane.f32.xlu0 %v906
    %v908 = vpop.xlane.xlu0 %907
    %v909 = vrcp.pop %v908
    %v910 = vmul.f32 %v909, 0.25
    %v911 = vmul.f32 %v904, %v910
    %v912 = vsel %vm441, %v911, 0.0
    %v913 = vrot.slane %v912, 4
    %v914 = vadd.f32 %v912, %v913
    %v915 = vrot.slane %v914, 2
    %v916 = vadd.f32 %v914, %v915
    %v917 = vrot.slane %v916, 1
    %v918 = vadd.f32 %v916, %v917
    %v919 = vsub.f32 %v918, 0.25
    %v920 = vand.u32 2147483647, %v919
    %v921 = vsel %vm470, %v920, -inf
    %922 = vmax.xlane.f32.xlu0 %v921
    %v923 = vpop.xlane.xlu0 %922
    %s924 = vtos %v923
    %p925 = scmp.le.f32.partialorder %s924, 1e-06
    %s926 = scalar_select %p925, 1, 0
    %s927 = scvt.s32.f32 %s926
    %v928 = vrcp.pop %v918
    %v929 = vmul.f32 %v928, 0.25
    %v930 = vmul.f32 %v911, %v929
    %v931 = vstv %s927
    %v932 = vmul.f32 %v931, %v911
    %s933 = ssub.f32 1.0, %s927
    %v934 = vstv %s933
    %v935 = vmul.f32 %v934, %v930
    %v936 = vadd.f32 %v932, %v935
    %v937 = vstv %s905
    %v938 = vmul.f32 %v937, %v936
    %s939 = ssub.f32 1.0, %s905
    %v940 = vstv %s939
    %v941 = vmul.f32 %v940, %v904
    %v942 = vadd.f32 %v938, %v941
    %s943 = smul.f32 %s905, %s933
    %v944 = vsel %vm441, %v942, 0.0
    %945 = vadd.xlane.f32.xlu0 %v944
    %v946 = vpop.xlane.xlu0 %945
    %v947 = vrcp.pop %v946
    %v948 = vmul.f32 %v947, 0.25
    %v949 = vmul.f32 %v942, %v948
    %v950 = vsel %vm441, %v949, 0.0
    %v951 = vrot.slane %v950, 4
    %v952 = vadd.f32 %v950, %v951
    %v953 = vrot.slane %v952, 2
    %v954 = vadd.f32 %v952, %v953
    %v955 = vrot.slane %v954, 1
    %v956 = vadd.f32 %v954, %v955
    %v957 = vsub.f32 %v956, 0.25
    %v958 = vand.u32 2147483647, %v957
    %v959 = vsel %vm470, %v958, -inf
    %960 = vmax.xlane.f32.xlu0 %v959
    %v961 = vpop.xlane.xlu0 %960
    %s962 = vtos %v961
    %p963 = scmp.le.f32.partialorder %s962, 1e-06
    %s964 = scalar_select %p963, 1, 0
    %s965 = scvt.s32.f32 %s964
    %v966 = vrcp.pop %v956
    %v967 = vmul.f32 %v966, 0.25
    %v968 = vmul.f32 %v949, %v967
    %v969 = vstv %s965
    %v970 = vmul.f32 %v969, %v949
    %s971 = ssub.f32 1.0, %s965
    %v972 = vstv %s971
    %v973 = vmul.f32 %v972, %v968
    %v974 = vadd.f32 %v970, %v973
    %v975 = vstv %s943
    %v976 = vmul.f32 %v975, %v974
    %s977 = ssub.f32 1.0, %s943
    %v978 = vstv %s977
    %v979 = vmul.f32 %v978, %v942
    %v980 = vadd.f32 %v976, %v979
    %s981 = smul.f32 %s943, %s971
    %v982 = vsel %vm441, %v980, 0.0
    %983 = vadd.xlane.f32.xlu0 %v982
    %v984 = vpop.xlane.xlu0 %983
    %v985 = vrcp.pop %v984
    %v986 = vmul.f32 %v985, 0.25
    %v987 = vmul.f32 %v980, %v986
    %v988 = vsel %vm441, %v987, 0.0
    %v989 = vrot.slane %v988, 4
    %v990 = vadd.f32 %v988, %v989
    %v991 = vrot.slane %v990, 2
    %v992 = vadd.f32 %v990, %v991
    %v993 = vrot.slane %v992, 1
    %v994 = vadd.f32 %v992, %v993
    %v995 = vsub.f32 %v994, 0.25
    %v996 = vand.u32 2147483647, %v995
    %v997 = vsel %vm470, %v996, -inf
    %998 = vmax.xlane.f32.xlu0 %v997
    %v999 = vpop.xlane.xlu0 %998
    %s1000 = vtos %v999
    %p1001 = scmp.le.f32.partialorder %s1000, 1e-06
    %s1002 = scalar_select %p1001, 1, 0
    %s1003 = scvt.s32.f32 %s1002
    %v1004 = vrcp.pop %v994
    %v1005 = vmul.f32 %v1004, 0.25
    %v1006 = vmul.f32 %v987, %v1005
    %v1007 = vstv %s1003
    %v1008 = vmul.f32 %v1007, %v987
    %s1009 = ssub.f32 1.0, %s1003
    %v1010 = vstv %s1009
    %v1011 = vmul.f32 %v1010, %v1006
    %v1012 = vadd.f32 %v1008, %v1011
    %v1013 = vstv %s981
    %v1014 = vmul.f32 %v1013, %v1012
    %s1015 = ssub.f32 1.0, %s981
    %v1016 = vstv %s1015
    %v1017 = vmul.f32 %v1016, %v980
    %v1018 = vadd.f32 %v1014, %v1017
    %s1019 = smul.f32 %s981, %s1009
    %v1020 = vsel %vm441, %v1018, 0.0
    %1021 = vadd.xlane.f32.xlu0 %v1020
    %v1022 = vpop.xlane.xlu0 %1021
    %v1023 = vrcp.pop %v1022
    %v1024 = vmul.f32 %v1023, 0.25
    %v1025 = vmul.f32 %v1018, %v1024
    %v1026 = vsel %vm441, %v1025, 0.0
    %v1027 = vrot.slane %v1026, 4
    %v1028 = vadd.f32 %v1026, %v1027
    %v1029 = vrot.slane %v1028, 2
    %v1030 = vadd.f32 %v1028, %v1029
    %v1031 = vrot.slane %v1030, 1
    %v1032 = vadd.f32 %v1030, %v1031
    %v1033 = vsub.f32 %v1032, 0.25
    %v1034 = vand.u32 2147483647, %v1033
    %v1035 = vsel %vm470, %v1034, -inf
    %1036 = vmax.xlane.f32.xlu0 %v1035
    %v1037 = vpop.xlane.xlu0 %1036
    %s1038 = vtos %v1037
    %p1039 = scmp.le.f32.partialorder %s1038, 1e-06
    %s1040 = scalar_select %p1039, 1, 0
    %s1041 = scvt.s32.f32 %s1040
    %v1042 = vrcp.pop %v1032
    %v1043 = vmul.f32 %v1042, 0.25
    %v1044 = vmul.f32 %v1025, %v1043
    %v1045 = vstv %s1041
    %v1046 = vmul.f32 %v1045, %v1025
    %s1047 = ssub.f32 1.0, %s1041
    %v1048 = vstv %s1047
    %v1049 = vmul.f32 %v1048, %v1044
    %v1050 = vadd.f32 %v1046, %v1049
    %v1051 = vstv %s1019
    %v1052 = vmul.f32 %v1051, %v1050
    %s1053 = ssub.f32 1.0, %s1019
    %v1054 = vstv %s1053
    %v1055 = vmul.f32 %v1054, %v1018
    %v1056 = vadd.f32 %v1052, %v1055
    %s1057 = smul.f32 %s1019, %s1047
    %v1058 = vsel %vm441, %v1056, 0.0
    %1059 = vadd.xlane.f32.xlu0 %v1058
    %v1060 = vpop.xlane.xlu0 %1059
    %v1061 = vrcp.pop %v1060
    %v1062 = vmul.f32 %v1061, 0.25
    %v1063 = vmul.f32 %v1056, %v1062
    %v1064 = vsel %vm441, %v1063, 0.0
    %v1065 = vrot.slane %v1064, 4
    %v1066 = vadd.f32 %v1064, %v1065
    %v1067 = vrot.slane %v1066, 2
    %v1068 = vadd.f32 %v1066, %v1067
    %v1069 = vrot.slane %v1068, 1
    %v1070 = vadd.f32 %v1068, %v1069
    %v1071 = vsub.f32 %v1070, 0.25
    %v1072 = vand.u32 2147483647, %v1071
    %v1073 = vsel %vm470, %v1072, -inf
    %1074 = vmax.xlane.f32.xlu0 %v1073
    %v1075 = vpop.xlane.xlu0 %1074
    %s1076 = vtos %v1075
    %p1077 = scmp.le.f32.partialorder %s1076, 1e-06
    %s1078 = scalar_select %p1077, 1, 0
    %s1079 = scvt.s32.f32 %s1078
    %v1080 = vrcp.pop %v1070
    %v1081 = vmul.f32 %v1080, 0.25
    %v1082 = vmul.f32 %v1063, %v1081
    %v1083 = vstv %s1079
    %v1084 = vmul.f32 %v1083, %v1063
    %s1085 = ssub.f32 1.0, %s1079
    %v1086 = vstv %s1085
    %v1087 = vmul.f32 %v1086, %v1082
    %v1088 = vadd.f32 %v1084, %v1087
    %v1089 = vstv %s1057
    %v1090 = vmul.f32 %v1089, %v1088
    %s1091 = ssub.f32 1.0, %s1057
    %v1092 = vstv %s1091
    %v1093 = vmul.f32 %v1092, %v1056
    %v1094 = vadd.f32 %v1090, %v1093
    %s1095 = smul.f32 %s1057, %s1085
    %v1096 = vsel %vm441, %v1094, 0.0
    %1097 = vadd.xlane.f32.xlu0 %v1096
    %v1098 = vpop.xlane.xlu0 %1097
    %v1099 = vrcp.pop %v1098
    %v1100 = vmul.f32 %v1099, 0.25
    %v1101 = vmul.f32 %v1094, %v1100
    %v1102 = vsel %vm441, %v1101, 0.0
    %v1103 = vrot.slane %v1102, 4
    %v1104 = vadd.f32 %v1102, %v1103
    %v1105 = vrot.slane %v1104, 2
    %v1106 = vadd.f32 %v1104, %v1105
    %v1107 = vrot.slane %v1106, 1
    %v1108 = vadd.f32 %v1106, %v1107
    %v1109 = vsub.f32 %v1108, 0.25
    %v1110 = vand.u32 2147483647, %v1109
    %v1111 = vsel %vm470, %v1110, -inf
    %1112 = vmax.xlane.f32.xlu0 %v1111
    %v1113 = vpop.xlane.xlu0 %1112
    %s1114 = vtos %v1113
    %p1115 = scmp.le.f32.partialorder %s1114, 1e-06
    %s1116 = scalar_select %p1115, 1, 0
    %s1117 = scvt.s32.f32 %s1116
    %v1118 = vrcp.pop %v1108
    %v1119 = vmul.f32 %v1118, 0.25
    %v1120 = vmul.f32 %v1101, %v1119
    %v1121 = vstv %s1117
    %v1122 = vmul.f32 %v1121, %v1101
    %s1123 = ssub.f32 1.0, %s1117
    %v1124 = vstv %s1123
    %v1125 = vmul.f32 %v1124, %v1120
    %v1126 = vadd.f32 %v1122, %v1125
    %v1127 = vstv %s1095
    %v1128 = vmul.f32 %v1127, %v1126
    %s1129 = ssub.f32 1.0, %s1095
    %v1130 = vstv %s1129
    %v1131 = vmul.f32 %v1130, %v1094
    %v1132 = vadd.f32 %v1128, %v1131
    %s1133 = smul.f32 %s1095, %s1123
    %v1134 = vsel %vm441, %v1132, 0.0
    %1135 = vadd.xlane.f32.xlu0 %v1134
    %v1136 = vpop.xlane.xlu0 %1135
    %v1137 = vrcp.pop %v1136
    %v1138 = vmul.f32 %v1137, 0.25
    %v1139 = vmul.f32 %v1132, %v1138
    %v1140 = vsel %vm441, %v1139, 0.0
    %v1141 = vrot.slane %v1140, 4
    %v1142 = vadd.f32 %v1140, %v1141
    %v1143 = vrot.slane %v1142, 2
    %v1144 = vadd.f32 %v1142, %v1143
    %v1145 = vrot.slane %v1144, 1
    %v1146 = vadd.f32 %v1144, %v1145
    %v1147 = vsub.f32 %v1146, 0.25
    %v1148 = vand.u32 2147483647, %v1147
    %v1149 = vsel %vm470, %v1148, -inf
    %1150 = vmax.xlane.f32.xlu0 %v1149
    %v1151 = vpop.xlane.xlu0 %1150
    %s1152 = vtos %v1151
    %p1153 = scmp.le.f32.partialorder %s1152, 1e-06
    %s1154 = scalar_select %p1153, 1, 0
    %s1155 = scvt.s32.f32 %s1154
    %v1156 = vrcp.pop %v1146
    %v1157 = vmul.f32 %v1156, 0.25
    %v1158 = vmul.f32 %v1139, %v1157
    %v1159 = vstv %s1155
    %v1160 = vmul.f32 %v1159, %v1139
    %s1161 = ssub.f32 1.0, %s1155
    %v1162 = vstv %s1161
    %v1163 = vmul.f32 %v1162, %v1158
    %v1164 = vadd.f32 %v1160, %v1163
    %v1165 = vstv %s1133
    %v1166 = vmul.f32 %v1165, %v1164
    %s1167 = ssub.f32 1.0, %s1133
    %v1168 = vstv %s1167
    %v1169 = vmul.f32 %v1168, %v1132
    %v1170 = vadd.f32 %v1166, %v1169
    %s1171 = smul.f32 %s1133, %s1161
    %v1172 = vsel %vm441, %v1170, 0.0
    %1173 = vadd.xlane.f32.xlu0 %v1172
    %v1174 = vpop.xlane.xlu0 %1173
    %v1175 = vrcp.pop %v1174
    %v1176 = vmul.f32 %v1175, 0.25
    %v1177 = vmul.f32 %v1170, %v1176
    %v1178 = vsel %vm441, %v1177, 0.0
    %v1179 = vrot.slane %v1178, 4
    %v1180 = vadd.f32 %v1178, %v1179
    %v1181 = vrot.slane %v1180, 2
    %v1182 = vadd.f32 %v1180, %v1181
    %v1183 = vrot.slane %v1182, 1
    %v1184 = vadd.f32 %v1182, %v1183
    %v1185 = vsub.f32 %v1184, 0.25
    %v1186 = vand.u32 2147483647, %v1185
    %v1187 = vsel %vm470, %v1186, -inf
    %1188 = vmax.xlane.f32.xlu0 %v1187
    %v1189 = vpop.xlane.xlu0 %1188
    %s1190 = vtos %v1189
    %p1191 = scmp.le.f32.partialorder %s1190, 1e-06
    %s1192 = scalar_select %p1191, 1, 0
    %s1193 = scvt.s32.f32 %s1192
    %v1194 = vrcp.pop %v1184
    %v1195 = vmul.f32 %v1194, 0.25
    %v1196 = vmul.f32 %v1177, %v1195
    %v1197 = vstv %s1193
    %v1198 = vmul.f32 %v1197, %v1177
    %s1199 = ssub.f32 1.0, %s1193
    %v1200 = vstv %s1199
    %v1201 = vmul.f32 %v1200, %v1196
    %v1202 = vadd.f32 %v1198, %v1201
    %v1203 = vstv %s1171
    %v1204 = vmul.f32 %v1203, %v1202
    %s1205 = ssub.f32 1.0, %s1171
    %v1206 = vstv %s1205
    %v1207 = vmul.f32 %v1206, %v1170
    %v1208 = vadd.f32 %v1204, %v1207
    %v1209 = vmul.f32 %v1208, %v450
    %v1210 = vsel %vm441, %v1209, 0.0
    %1211 = vadd.xlane.f32.xlu0 %v1210
    %v1212 = vpop.xlane.xlu0 %1211
    %v1213 = vrot.slane %v1212, 4
    %v1214 = vadd.f32 %v1212, %v1213
    %v1215 = vrot.slane %v1214, 2
    %v1216 = vadd.f32 %v1214, %v1215
    %v1217 = vrot.slane %v1216, 1
    %v1218 = vadd.f32 %v1216, %v1217
    %s1219 = vtos %v1218
    %s1220 = scalar_lea.smem [#allocation2], 0
    %1221 = sst [smem:[%s1220]] %s1219
    %1222 = vst.msk [vmem:[#allocation5] sm:$0xf] %vm441, %v1208
    %1223 = vst.msk [vmem:[#allocation6] sm:$0xf] %vm441, %v450
    // Predicated region
    $region14: #{mixgnn_loss_forward.1} parent=1 // pred_check
      _
    $region15: #{mixgnn_loss_forward.1} parent=1 // pred_check_branch
      %1225 = sbr.rel (0) target = $region17
    $region16: #{mixgnn_loss_forward.1} parent=1 // pred_region
      %s1227 = ssub.s32 16, 16
      %1228 = vsyncadd [#allocation4], %s1227
      %1231 = dma.smem_to_hbm [#allocation2], 16, %s3, [#allocation4]
    $region17: #{mixgnn_loss_forward.1} parent=1 // pred_fallthru
      _
    // Predicated region
    $region18: #{mixgnn_loss_forward.1} parent=1 // pred_check
      _
    $region19: #{mixgnn_loss_forward.1} parent=1 // pred_check_branch
      %1233 = sbr.rel (0) target = $region21
    $region20: #{mixgnn_loss_forward.1} parent=1 // pred_region
      %s1235 = ssub.s32 64, 64
      %1236 = vsyncadd [#allocation3], %s1235
      %s1238 = sshll.u32 [#allocation5], 4
      %s1239 = int_to_ptr.vmem [resolvable:$true] %s1238
      %1241 = dma.vmem_to_hbm [thread:$0]  %s1239, 64, %s4, [#allocation3]
    $region21: #{mixgnn_loss_forward.1} parent=1 // pred_fallthru
      _
    // Predicated region
    $region22: #{mixgnn_loss_forward.1} parent=1 // pred_check
      _
    $region23: #{mixgnn_loss_forward.1} parent=1 // pred_check_branch
      %1243 = sbr.rel (0) target = $region25
    $region24: #{mixgnn_loss_forward.1} parent=1 // pred_region
      %s1245 = ssub.s32 64, 64
      %1246 = vsyncadd [#allocation7], %s1245
      %s1248 = sshll.u32 [#allocation6], 4
      %s1249 = int_to_ptr.vmem [resolvable:$true] %s1248
      %1251 = dma.vmem_to_hbm [thread:$0]  %s1249, 64, %s5, [#allocation7]
    $region25: #{mixgnn_loss_forward.1} parent=1 // pred_fallthru
      _
    // Predicated region
    $region26: #{mixgnn_loss_forward.1} parent=1 // pred_check
      _
    $region27: #{mixgnn_loss_forward.1} parent=1 // pred_check_branch
      %1253 = sbr.rel (0) target = $region29
    $region28: #{mixgnn_loss_forward.1} parent=1 // pred_region
      %1254 = dma.done [#allocation4], 16
    $region29: #{mixgnn_loss_forward.1} parent=1 // pred_fallthru
      _
    // Predicated region
    $region30: #{mixgnn_loss_forward.1} parent=1 // pred_check
      _
    $region31: #{mixgnn_loss_forward.1} parent=1 // pred_check_branch
      %1256 = sbr.rel (0) target = $region33
    $region32: #{mixgnn_loss_forward.1} parent=1 // pred_region
      %1257 = dma.done [#allocation3], 64
    $region33: #{mixgnn_loss_forward.1} parent=1 // pred_fallthru
      _
    // Predicated region
    $region34: #{mixgnn_loss_forward.1} parent=1 // pred_check
      _
    $region35: #{mixgnn_loss_forward.1} parent=1 // pred_check_branch
      %1259 = sbr.rel (0) target = $region37
    $region36: #{mixgnn_loss_forward.1} parent=1 // pred_region
      %1260 = dma.done [#allocation7], 64
    $region37: #{mixgnn_loss_forward.1} parent=1 // pred_fallthru
      _
    %1261 = sfence
    %1262 = vsyncpa [#allocation3], 1
    %1263 = vsyncpa [#allocation7], 1
    %1264 = vsyncpa [#allocation4], 1

</llo_original>
